<compile_context>
chip_gen: v5e
topology: v5e:2x2
jax: 0.10.0
libtpu: 0.0.40
codegen_flags: <defaults>
</compile_context>

<pallas_src>
import functools

import jax
import jax.numpy as jnp
from jax import lax
from jax.experimental import pallas as pl
from jax.experimental.pallas import tpu as pltpu

CONTEXT_WINDOW = 3
WV_DTYPE = jnp.float32       # set to jnp.bfloat16 for large value vocabs
ROWS_PER_BLOCK = 128         # Nb upper bound; retune per TPU generation


def _round_up(x, m):
    return (x + m - 1) // m * m


def main_model_kernel(vocab_value, context_window,
                      embeds_ref, h0_ref, c0_ref,
                      wih_ref, whh_ref, b_ref,
                      wm_ref, vrow_ref, w1_ref,
                      wgh_ref, wgc_ref,
                      wv_ref, bv_ref,
                      wsh_ref, wsc_ref, bs_ref,
                      place_ref,
                      out_ref,
                      gx_ref, mt_ref):
    S, Nb, D = embeds_ref.shape
    H = h0_ref.shape[1]
    cw = context_window
    Vv = vocab_value
    OUT_W = out_ref.shape[1]

    # ---- Hoisted input projection: one (S*Nb, D) x (D, 4H) MXU matmul ----
    # embeds arrives time-major (S, Nb, D); Nb is a multiple of 8, so collapsing
    # the leading axes into sublanes is layout-preserving.
    emb2 = embeds_ref[...].reshape(S * Nb, D)
    gx_ref[...] = (jnp.dot(emb2, wih_ref[...],
                           preferred_element_type=jnp.float32) + b_ref[...])

    whh = whh_ref[...]       # hoisted: loaded once, reused every step

    def cell(t, h, c):
        start = t * Nb
        if not isinstance(start, int):
            start = pl.multiple_of(start, Nb)
        gates = (jnp.dot(h, whh, preferred_element_type=jnp.float32)
                 + gx_ref[pl.ds(start, Nb), :])                   # (Nb, 4H)
        # Gates pre-ordered wrapper-side to (i, f, o, g):
        sig = jax.nn.sigmoid(gates[:, :3 * H])                    # i | f | o
        g_g = jnp.tanh(gates[:, 3 * H:])                          # g
        c_new = sig[:, H:2 * H] * c + sig[:, 0:H] * g_g           # f*c + i*g
        h_new = sig[:, 2 * H:3 * H] * jnp.tanh(c_new)             # o*tanh(c)
        return h_new, c_new

    # Phase 1: recurrence only (partial unroll; full unroll blows up code size
    # and vreg live ranges for long sequences).
    def body(t, carry):
        h, c = carry
        return cell(t, h, c)

    h, c = lax.fori_loop(0, S - cw - 1, body,
                         (h0_ref[...], c0_ref[...]), unroll=4)

    # Phase 2: keep the cw hidden states preceding the final step (Mt rows).
    for j in range(cw):
        h, c = cell(S - cw - 1 + j, h, c)
        mt_ref[j] = h
    hn, _ = cell(S - 1, h, c)                                     # (Nb, H)

    # ---- Context attention, batched over the Nb rows ----
    hproj = jnp.dot(hn, w1_ref[...], preferred_element_type=jnp.float32)
    score_cols = []
    for j in range(cw):
        tmat = jnp.tanh(jnp.dot(mt_ref[j], wm_ref[...],
                                preferred_element_type=jnp.float32) + hproj)
        score_cols.append(jnp.sum(tmat * vrow_ref[...], axis=1, keepdims=True))
    scores = jnp.concatenate(score_cols, axis=1)                  # (Nb, cw)
    smax = jnp.max(scores, axis=1, keepdims=True)
    lse = jnp.log(jnp.sum(jnp.exp(scores - smax), axis=1, keepdims=True))
    alphat = scores - smax - lse                                  # log-softmax
    # NOTE: the original model weights Mt by the *log*-softmax (its quirk);
    # kept intentionally — do not replace with exp(alphat).
    ct = alphat[:, 0:1] * mt_ref[0]
    for j in range(1, cw):
        ct = ct + alphat[:, j:j + 1] * mt_ref[j]                  # (Nb, H)

    # ---- Parent attention over the (lane-padded) value vocab ----
    Gt = jnp.tanh(jnp.dot(hn, wgh_ref[...], preferred_element_type=jnp.float32)
                  + jnp.dot(ct, wgc_ref[...], preferred_element_type=jnp.float32))
    logits = (jnp.dot(Gt.astype(wv_ref.dtype), wv_ref[...],
                      preferred_element_type=jnp.float32) + bv_ref[...])
    lmax = jnp.max(logits, axis=1, keepdims=True)
    llse = jnp.log(jnp.sum(jnp.exp(logits - lmax), axis=1, keepdims=True))
    yt_value = logits - lmax - llse              # padded lanes stay at -inf

    # ---- Pointer-mixture gate ----
    s_pre = (jnp.sum(hn * wsh_ref[...], axis=1, keepdims=True)
             + jnp.sum(ct * wsc_ref[...], axis=1, keepdims=True)
             + bs_ref[...])
    st = jax.nn.sigmoid(s_pre)                                    # (Nb, 1)

    # ---- Lane-dense output block: [st*yt (Vv) | (1-st)*alpha (cw) | 0-pad] ----
    a_part = jnp.dot((1.0 - st) * alphat, place_ref[...],
                     preferred_element_type=jnp.float32)          # (Nb, OUT_W)
    lane = lax.broadcasted_iota(jnp.int32, (Nb, OUT_W), 1)
    # Keep the where: padded yt lanes are -inf (and st*(-inf) may be NaN for
    # underflowing st) — they must be discarded, not simplified away.
    out_ref[...] = jnp.where(lane < Vv, st * yt_value, a_part)


def init_params(key, vocab_value, value_dim, vocab_type, type_dim, hidden_dim):
    ks = jax.random.split(key, 12)
    D = value_dim + type_dim
    H = hidden_dim
    s = 0.1
    return {
        "value_emb": s * jax.random.normal(ks[0], (vocab_value, value_dim), jnp.float32),
        "type_emb": s * jax.random.normal(ks[1], (vocab_type, type_dim), jnp.float32),
        # nn.LSTM(value_dim + type_dim, hidden_dim), gate order i, f, g, o
        "w_ih": s * jax.random.normal(ks[2], (4 * H, D), jnp.float32),
        "w_hh": s * jax.random.normal(ks[3], (4 * H, H), jnp.float32),
        "b_ih": s * jax.random.normal(ks[4], (4 * H,), jnp.float32),
        "b_hh": s * jax.random.normal(ks[5], (4 * H,), jnp.float32),
        # Context_atten: Wm and V initialized to ones in the module __init__
        "Wm": jnp.ones((H, H), jnp.float32),
        "V": jnp.ones((H, 1), jnp.float32),
        "W1": s * jax.random.normal(ks[6], (H, H), jnp.float32),       # no bias
        # Parent_atten
        "Wg": s * jax.random.normal(ks[7], (H, 2 * H), jnp.float32),   # no bias
        "Wv": s * jax.random.normal(ks[8], (vocab_value, H), jnp.float32),
        "bv": s * jax.random.normal(ks[9], (vocab_value,), jnp.float32),
        # Point_Mixture
        "Ws": s * jax.random.normal(ks[10], (1, 2 * H), jnp.float32),
        "bs": s * jax.random.normal(ks[11], (1,), jnp.float32),
    }


@jax.jit
def main_model_forward(params, values_idx, types_idx, h0, c0):
    """Batched forward: each of the N rows is an independent B==1 forward pass."""
    # glue: embedding gathers + parameter re-layout (transposes / splits / pad)
    emb_v = jnp.take(params["value_emb"], values_idx, axis=0)     # (N, S, value_dim)
    emb_t = jnp.take(params["type_emb"], types_idx, axis=0)       # (N, S, type_dim)
    embeds = jnp.concatenate([emb_v, emb_t], axis=2)              # (N, S, D)
    N, S, D = embeds.shape
    H = h0.shape[-1]
    Vv = params["Wv"].shape[0]
    cw = CONTEXT_WINDOW
    assert S >= cw + 1, "sequence length must be >= context_window + 1"
    out_w = _round_up(Vv + cw, 128)                               # lane-dense width

    # Rows per grid block: multiple of 8 (sublane-dense stores); keep >= 2
    # blocks so both v7x TensorCores get work.  v5e sweet spot ~128; v6e can
    # raise ROWS_PER_BLOCK to 256 if VMEM allows.
    Nb = min(ROWS_PER_BLOCK, _round_up(N, 8))
    if _round_up(N, Nb) // Nb < 2 and Nb > 8:
        Nb = max(8, _round_up(Nb // 2, 8))
    N_pad = _round_up(N, Nb)

    # Gate reorder (i, f, g, o) -> (i, f, o, g): the kernel then runs one
    # sigmoid over 3H lanes and one tanh over the trailing H lanes.
    def reorder_gates(w):
        return jnp.concatenate([w[:2 * H], w[3 * H:], w[2 * H:3 * H]], axis=0)

    wih_t = reorder_gates(params["w_ih"]).T                       # (D, 4H)
    whh_t = reorder_gates(params["w_hh"]).T                       # (H, 4H)
    b = reorder_gates(params["b_ih"] + params["b_hh"]).reshape(1, 4 * H)
    vrow = params["V"].reshape(1, H)
    w1_t = params["W1"].T
    wgh_t = params["Wg"][:, :H].T                                 # (H, H)
    wgc_t = params["Wg"][:, H:].T                                 # (H, H)
    # Vocab projection padded to the lane-dense output width; bias pad = -inf
    # keeps the log-softmax normalization exact (padded Wv columns are zero).
    wv_t = jnp.zeros((H, out_w), WV_DTYPE).at[:, :Vv].set(params["Wv"].T.astype(WV_DTYPE))
    bv = jnp.full((1, out_w), -jnp.inf, jnp.float32).at[:, :Vv].set(params["bv"])
    wsh = params["Ws"][:, :H]                                     # (1, H)
    wsc = params["Ws"][:, H:]                                     # (1, H)
    bs = params["bs"].reshape(1, 1)
    # Scatter matrix for the alpha columns, precomputed once.
    place = jnp.zeros((cw, out_w), jnp.float32).at[
        jnp.arange(cw), Vv + jnp.arange(cw)].set(1.0)

    # Time-major embeds so the per-step slice of the hoisted gate projection is
    # a contiguous, aligned Nb-row sublane block.
    embeds_t = jnp.transpose(embeds, (1, 0, 2))                   # (S, N, D)
    if N_pad != N:
        pad = N_pad - N
        embeds_t = jnp.pad(embeds_t, ((0, 0), (0, pad), (0, 0)))
        h0 = jnp.pad(h0, ((0, pad), (0, 0)))
        c0 = jnp.pad(c0, ((0, pad), (0, 0)))

    args = (embeds_t, h0, c0, wih_t, whh_t, b,
            params["Wm"], vrow, w1_t, wgh_t, wgc_t,
            wv_t, bv, wsh, wsc, bs, place)

    def resident(a):
        nd = a.ndim
        return pl.BlockSpec(a.shape, lambda n, _nd=nd: (0,) * _nd)

    in_specs = [
        pl.BlockSpec((S, Nb, D), lambda n: (0, n, 0)),            # embeds (Nb rows)
        pl.BlockSpec((Nb, H), lambda n: (n, 0)),                  # h0
        pl.BlockSpec((Nb, H), lambda n: (n, 0)),                  # c0
        resident(wih_t), resident(whh_t), resident(b),
        resident(params["Wm"]), resident(vrow), resident(w1_t),
        resident(wgh_t), resident(wgc_t),
        resident(wv_t),   # constant block index -> DMA'd once per core
        resident(bv), resident(wsh), resident(wsc), resident(bs),
        resident(place),
    ]

    # VMEM budget (re-derived for v7x's 64 MiB/TC and v5e's 16 MiB default).
    itemsize_wv = jnp.dtype(WV_DTYPE).itemsize
    vmem_est = (2 * S * Nb * D * 4            # double-buffered embeds block
                + 2 * Nb * out_w * 4          # double-buffered output block
                + S * Nb * 4 * H * 4          # gx scratch
                + cw * Nb * H * 4             # Mt scratch
                + H * out_w * itemsize_wv     # resident Wv
                + (D + H) * 4 * H * 4         # LSTM weights
                + (cw + 1) * out_w * 4)       # place + bv
    vmem_limit = int(min(max(2 * vmem_est, 32 * 1024 * 1024), 48 * 1024 * 1024))

    kernel = functools.partial(main_model_kernel, Vv, cw)
    out = pl.pallas_call(
        kernel,
        out_shape=jax.ShapeDtypeStruct((N_pad, out_w), jnp.float32),
        grid=(N_pad // Nb,),
        in_specs=in_specs,
        out_specs=pl.BlockSpec((Nb, out_w), lambda n: (n, 0)),
        scratch_shapes=[
            pltpu.VMEM((S * Nb, 4 * H), jnp.float32),   # hoisted gate projection
            pltpu.VMEM((cw, Nb, H), jnp.float32),       # last cw hidden states (Mt)
        ],
        compiler_params=pltpu.CompilerParams(
            dimension_semantics=("parallel",),          # shard blocks across TCs (v7x)
            vmem_limit_bytes=vmem_limit),
    )(*args)

    return out[:N, :Vv + cw]                                      # (N, Vv + cw)


def _reference_single(params, values_idx, types_idx, h0, c0):
    """Pure-JAX re-implementation of the PyTorch forward (B == 1)."""
    H = h0.shape[-1]
    cw = CONTEXT_WINDOW
    emb_v = jnp.take(params["value_emb"], values_idx, axis=0)
    emb_t = jnp.take(params["type_emb"], types_idx, axis=0)
    embeds = jnp.concatenate([emb_v, emb_t], axis=1)
    S = embeds.shape[0]
    b = params["b_ih"] + params["b_hh"]
    h = h0.reshape(1, H)
    c = c0.reshape(1, H)
    outs = []
    for t in range(S):
        x = embeds[t:t + 1]
        gates = x @ params["w_ih"].T + h @ params["w_hh"].T + b
        i = jax.nn.sigmoid(gates[:, :H])
        f = jax.nn.sigmoid(gates[:, H:2 * H])
        g = jnp.tanh(gates[:, 2 * H:3 * H])
        o = jax.nn.sigmoid(gates[:, 3 * H:])
        c = f * c + i * g
        h = o * jnp.tanh(c)
        outs.append(h)
    lstm_out = jnp.concatenate(outs, axis=0)
    hn = h
    Mt = lstm_out[S - cw - 1:S - 1]
    At = jnp.tanh(Mt @ params["Wm"]
                  + jnp.ones((cw, 1)) @ (hn @ params["W1"].T)) @ params["V"]
    alphat = jax.nn.log_softmax(At.reshape(1, -1), axis=1)
    ct = alphat @ Mt
    Gt = jnp.tanh(jnp.concatenate([hn, ct], axis=1) @ params["Wg"].T)
    yt_value = jax.nn.log_softmax(Gt @ params["Wv"].T + params["bv"], axis=1)
    st = jax.nn.sigmoid(jnp.concatenate([hn, ct], axis=1) @ params["Ws"].T + params["bs"])
    return jnp.concatenate([st * yt_value, (1 - st) * alphat], axis=1)


_reference_single_jit = jax.jit(_reference_single)


def main_model_reference(params, values_idx, types_idx, h0, c0):
    rows = [_reference_single_jit(params, values_idx[n], types_idx[n], h0[n], c0[n])
            for n in range(values_idx.shape[0])]
    return jnp.concatenate(rows, axis=0)


if __name__ == "__main__":
    # Small, deterministic shapes consistent with the module's forward.
    vocab_value, value_dim = 40, 16
    vocab_type, type_dim = 20, 16
    hidden_dim = 32
    batch = 16              # independent sequences (each keeps B == 1 semantics)
    seq_len = 8             # must be >= context_window + 1

    key = jax.random.PRNGKey(0)
    kp, kv, kt = jax.random.split(key, 3)
    params = init_params(kp, vocab_value, value_dim, vocab_type, type_dim, hidden_dim)

    values_idx = jax.random.randint(kv, (batch, seq_len), 0, vocab_value)
    types_idx = jax.random.randint(kt, (batch, seq_len), 0, vocab_type)
    # initHidden()
    h0 = jnp.zeros((batch, hidden_dim), jnp.float32)
    c0 = jnp.zeros((batch, hidden_dim), jnp.float32)

    out = main_model_forward(params, values_idx, types_idx, h0, c0)
    out = jax.block_until_ready(out)

    ref = main_model_reference(params, values_idx, types_idx, h0, c0)
    assert out.shape == (batch, vocab_value + CONTEXT_WINDOW), out.shape
    max_diff = float(jnp.max(jnp.abs(out - ref)))
    if max_diff > 1e-3:
        raise AssertionError(f"mismatch vs reference: max abs diff = {max_diff:e}")

    print("KERNEL_OK")
</pallas_src>

<mosaic_0001>
module attributes {stable_mosaic.version = 11 : i64} {
  func.func @main_model_kernel(%arg0: i32, %arg1: memref<8x8x32xf32, #tpu.memory_space<vmem>>, %arg2: memref<8x32xf32, #tpu.memory_space<vmem>>, %arg3: memref<8x32xf32, #tpu.memory_space<vmem>>, %arg4: memref<32x128xf32, #tpu.memory_space<vmem>>, %arg5: memref<32x128xf32, #tpu.memory_space<vmem>>, %arg6: memref<1x128xf32, #tpu.memory_space<vmem>>, %arg7: memref<32x32xf32, #tpu.memory_space<vmem>>, %arg8: memref<1x32xf32, #tpu.memory_space<vmem>>, %arg9: memref<32x32xf32, #tpu.memory_space<vmem>>, %arg10: memref<32x32xf32, #tpu.memory_space<vmem>>, %arg11: memref<32x32xf32, #tpu.memory_space<vmem>>, %arg12: memref<32x128xf32, #tpu.memory_space<vmem>>, %arg13: memref<1x128xf32, #tpu.memory_space<vmem>>, %arg14: memref<1x32xf32, #tpu.memory_space<vmem>>, %arg15: memref<1x32xf32, #tpu.memory_space<vmem>>, %arg16: memref<1x1xf32, #tpu.memory_space<vmem>>, %arg17: memref<3x128xf32, #tpu.memory_space<vmem>>, %arg18: memref<8x128xf32, #tpu.memory_space<vmem>>, %arg19: memref<64x128xf32, #tpu.memory_space<vmem>>, %arg20: memref<3x8x32xf32, #tpu.memory_space<vmem>>) attributes {dimension_semantics = [#tpu.dimension_semantics<parallel>], iteration_bounds = array<i64: 2>, scalar_prefetch = 0 : i64, scratch_operands = 2 : i64, tpu.core_type = #tpu.core_type<tc>, window_params = [{transform_indices = @transform_0, window_bounds = array<i64: 8, 8, 32>}, {transform_indices = @transform_1, window_bounds = array<i64: 8, 32>}, {transform_indices = @transform_2, window_bounds = array<i64: 8, 32>}, {pipeline_mode = #tpu.pipeline_mode<synchronous>, transform_indices = @transform_3, window_bounds = array<i64: 32, 128>}, {pipeline_mode = #tpu.pipeline_mode<synchronous>, transform_indices = @transform_4, window_bounds = array<i64: 32, 128>}, {pipeline_mode = #tpu.pipeline_mode<synchronous>, transform_indices = @transform_5, window_bounds = array<i64: 1, 128>}, {pipeline_mode = #tpu.pipeline_mode<synchronous>, transform_indices = @transform_6, window_bounds = array<i64: 32, 32>}, {pipeline_mode = #tpu.pipeline_mode<synchronous>, transform_indices = @transform_7, window_bounds = array<i64: 1, 32>}, {pipeline_mode = #tpu.pipeline_mode<synchronous>, transform_indices = @transform_8, window_bounds = array<i64: 32, 32>}, {pipeline_mode = #tpu.pipeline_mode<synchronous>, transform_indices = @transform_9, window_bounds = array<i64: 32, 32>}, {pipeline_mode = #tpu.pipeline_mode<synchronous>, transform_indices = @transform_10, window_bounds = array<i64: 32, 32>}, {pipeline_mode = #tpu.pipeline_mode<synchronous>, transform_indices = @transform_11, window_bounds = array<i64: 32, 128>}, {pipeline_mode = #tpu.pipeline_mode<synchronous>, transform_indices = @transform_12, window_bounds = array<i64: 1, 128>}, {pipeline_mode = #tpu.pipeline_mode<synchronous>, transform_indices = @transform_13, window_bounds = array<i64: 1, 32>}, {pipeline_mode = #tpu.pipeline_mode<synchronous>, transform_indices = @transform_14, window_bounds = array<i64: 1, 32>}, {pipeline_mode = #tpu.pipeline_mode<synchronous>, transform_indices = @transform_15, window_bounds = array<i64: 1, 1>}, {pipeline_mode = #tpu.pipeline_mode<synchronous>, transform_indices = @transform_16, window_bounds = array<i64: 3, 128>}, {transform_indices = @transform_17, window_bounds = array<i64: 8, 128>}]} {
    %c0 = arith.constant 0 : index
    %c0_0 = arith.constant 0 : index
    %c0_1 = arith.constant 0 : index
    %0 = vector.load %arg1[%c0, %c0_0, %c0_1] : memref<8x8x32xf32, #tpu.memory_space<vmem>>, vector<8x8x32xf32>
    %1 = vector.shape_cast %0 : vector<8x8x32xf32> to vector<64x32xf32>
    %c0_2 = arith.constant 0 : index
    %c0_3 = arith.constant 0 : index
    %2 = vector.load %arg4[%c0_2, %c0_3] : memref<32x128xf32, #tpu.memory_space<vmem>>, vector<32x128xf32>
    %cst = arith.constant dense<0.000000e+00> : vector<64x128xf32>
    %3 = tpu.matmul %1, %2, %cst {dimension_numbers = #tpu.dot_dimension_numbers<[1], [0], [0], [1], [0, 0, 1, 1], [], []>} : vector<64x32xf32>, vector<32x128xf32>, vector<64x128xf32> -> vector<64x128xf32>
    %c0_4 = arith.constant 0 : index
    %c0_5 = arith.constant 0 : index
    %4 = vector.load %arg6[%c0_4, %c0_5] : memref<1x128xf32, #tpu.memory_space<vmem>>, vector<1x128xf32>
    %5 = vector.broadcast %4 : vector<1x128xf32> to vector<64x128xf32>
    %6 = arith.addf %3, %5 : vector<64x128xf32>
    %c0_6 = arith.constant 0 : index
    %c0_7 = arith.constant 0 : index
    %7 = vector.load %arg19[%c0_6, %c0_7] : memref<64x128xf32, #tpu.memory_space<vmem>>, vector<64x128xf32>
    tpu.vector_store %arg19[%c0_6, %c0_7], %6 {strides = array<i32>} : memref<64x128xf32, #tpu.memory_space<vmem>>, vector<64x128xf32>,
    %c0_8 = arith.constant 0 : index
    %c0_9 = arith.constant 0 : index
    %8 = vector.load %arg5[%c0_8, %c0_9] : memref<32x128xf32, #tpu.memory_space<vmem>>, vector<32x128xf32>
    %c0_10 = arith.constant 0 : index
    %c0_11 = arith.constant 0 : index
    %9 = vector.load %arg2[%c0_10, %c0_11] : memref<8x32xf32, #tpu.memory_space<vmem>>, vector<8x32xf32>
    %c0_12 = arith.constant 0 : index
    %c0_13 = arith.constant 0 : index
    %10 = vector.load %arg3[%c0_12, %c0_13] : memref<8x32xf32, #tpu.memory_space<vmem>>, vector<8x32xf32>
    %c0_i32 = arith.constant 0 : i32
    %c8_i32 = arith.constant 8 : i32
    %11 = arith.muli %c0_i32, %c8_i32 : i32
    %12 = tpu.assume_multiple %11, 8 : i32
    %cst_14 = arith.constant dense<0.000000e+00> : vector<8x128xf32>
    %13 = tpu.matmul %9, %8, %cst_14 {dimension_numbers = #tpu.dot_dimension_numbers<[1], [0], [0], [1], [0, 0, 1, 1], [], []>} : vector<8x32xf32>, vector<32x128xf32>, vector<8x128xf32> -> vector<8x128xf32>
    %14 = arith.index_cast %12 : i32 to index
    %c0_15 = arith.constant 0 : index
    %15 = vector.load %arg19[%14, %c0_15] : memref<64x128xf32, #tpu.memory_space<vmem>>, vector<8x128xf32>
    %16 = arith.addf %13, %15 : vector<8x128xf32>
    %17 = vector.extract_strided_slice %16 {offsets = [0, 0], sizes = [8, 96], strides = [1, 1]} : vector<8x128xf32> to vector<8x96xf32>
    %18 = arith.negf %17 : vector<8x96xf32>
    %19 = math.exp %18 : vector<8x96xf32>
    %cst_16 = arith.constant 1.000000e+00 : f32
    %20 = vector.broadcast %cst_16 : f32 to vector<8x96xf32>
    %21 = arith.addf %20, %19 : vector<8x96xf32>
    %22 = arith.divf %20, %21 : vector<8x96xf32>
    %23 = vector.extract_strided_slice %16 {offsets = [0, 96], sizes = [8, 32], strides = [1, 1]} : vector<8x128xf32> to vector<8x32xf32>
    %24 = math.tanh %23 : vector<8x32xf32>
    %25 = vector.extract_strided_slice %22 {offsets = [0, 32], sizes = [8, 32], strides = [1, 1]} : vector<8x96xf32> to vector<8x32xf32>
    %26 = arith.mulf %25, %10 : vector<8x32xf32>
    %27 = vector.extract_strided_slice %22 {offsets = [0, 0], sizes = [8, 32], strides = [1, 1]} : vector<8x96xf32> to vector<8x32xf32>
    %28 = arith.mulf %27, %24 : vector<8x32xf32>
    %29 = arith.addf %26, %28 : vector<8x32xf32>
    %30 = vector.extract_strided_slice %22 {offsets = [0, 64], sizes = [8, 32], strides = [1, 1]} : vector<8x96xf32> to vector<8x32xf32>
    %31 = math.tanh %29 : vector<8x32xf32>
    %32 = arith.mulf %30, %31 : vector<8x32xf32>
    %c1_i32 = arith.constant 1 : i32
    %c8_i32_17 = arith.constant 8 : i32
    %33 = arith.muli %c1_i32, %c8_i32_17 : i32
    %34 = tpu.assume_multiple %33, 8 : i32
    %cst_18 = arith.constant dense<0.000000e+00> : vector<8x128xf32>
    %35 = tpu.matmul %32, %8, %cst_18 {dimension_numbers = #tpu.dot_dimension_numbers<[1], [0], [0], [1], [0, 0, 1, 1], [], []>} : vector<8x32xf32>, vector<32x128xf32>, vector<8x128xf32> -> vector<8x128xf32>
    %36 = arith.index_cast %34 : i32 to index
    %c0_19 = arith.constant 0 : index
    %37 = vector.load %arg19[%36, %c0_19] : memref<64x128xf32, #tpu.memory_space<vmem>>, vector<8x128xf32>
    %38 = arith.addf %35, %37 : vector<8x128xf32>
    %39 = vector.extract_strided_slice %38 {offsets = [0, 0], sizes = [8, 96], strides = [1, 1]} : vector<8x128xf32> to vector<8x96xf32>
    %40 = arith.negf %39 : vector<8x96xf32>
    %41 = math.exp %40 : vector<8x96xf32>
    %cst_20 = arith.constant 1.000000e+00 : f32
    %42 = vector.broadcast %cst_20 : f32 to vector<8x96xf32>
    %43 = arith.addf %42, %41 : vector<8x96xf32>
    %44 = arith.divf %42, %43 : vector<8x96xf32>
    %45 = vector.extract_strided_slice %38 {offsets = [0, 96], sizes = [8, 32], strides = [1, 1]} : vector<8x128xf32> to vector<8x32xf32>
    %46 = math.tanh %45 : vector<8x32xf32>
    %47 = vector.extract_strided_slice %44 {offsets = [0, 32], sizes = [8, 32], strides = [1, 1]} : vector<8x96xf32> to vector<8x32xf32>
    %48 = arith.mulf %47, %29 : vector<8x32xf32>
    %49 = vector.extract_strided_slice %44 {offsets = [0, 0], sizes = [8, 32], strides = [1, 1]} : vector<8x96xf32> to vector<8x32xf32>
    %50 = arith.mulf %49, %46 : vector<8x32xf32>
    %51 = arith.addf %48, %50 : vector<8x32xf32>
    %52 = vector.extract_strided_slice %44 {offsets = [0, 64], sizes = [8, 32], strides = [1, 1]} : vector<8x96xf32> to vector<8x32xf32>
    %53 = math.tanh %51 : vector<8x32xf32>
    %54 = arith.mulf %52, %53 : vector<8x32xf32>
    %c2_i32 = arith.constant 2 : i32
    %c8_i32_21 = arith.constant 8 : i32
    %55 = arith.muli %c2_i32, %c8_i32_21 : i32
    %56 = tpu.assume_multiple %55, 8 : i32
    %cst_22 = arith.constant dense<0.000000e+00> : vector<8x128xf32>
    %57 = tpu.matmul %54, %8, %cst_22 {dimension_numbers = #tpu.dot_dimension_numbers<[1], [0], [0], [1], [0, 0, 1, 1], [], []>} : vector<8x32xf32>, vector<32x128xf32>, vector<8x128xf32> -> vector<8x128xf32>
    %58 = arith.index_cast %56 : i32 to index
    %c0_23 = arith.constant 0 : index
    %59 = vector.load %arg19[%58, %c0_23] : memref<64x128xf32, #tpu.memory_space<vmem>>, vector<8x128xf32>
    %60 = arith.addf %57, %59 : vector<8x128xf32>
    %61 = vector.extract_strided_slice %60 {offsets = [0, 0], sizes = [8, 96], strides = [1, 1]} : vector<8x128xf32> to vector<8x96xf32>
    %62 = arith.negf %61 : vector<8x96xf32>
    %63 = math.exp %62 : vector<8x96xf32>
    %cst_24 = arith.constant 1.000000e+00 : f32
    %64 = vector.broadcast %cst_24 : f32 to vector<8x96xf32>
    %65 = arith.addf %64, %63 : vector<8x96xf32>
    %66 = arith.divf %64, %65 : vector<8x96xf32>
    %67 = vector.extract_strided_slice %60 {offsets = [0, 96], sizes = [8, 32], strides = [1, 1]} : vector<8x128xf32> to vector<8x32xf32>
    %68 = math.tanh %67 : vector<8x32xf32>
    %69 = vector.extract_strided_slice %66 {offsets = [0, 32], sizes = [8, 32], strides = [1, 1]} : vector<8x96xf32> to vector<8x32xf32>
    %70 = arith.mulf %69, %51 : vector<8x32xf32>
    %71 = vector.extract_strided_slice %66 {offsets = [0, 0], sizes = [8, 32], strides = [1, 1]} : vector<8x96xf32> to vector<8x32xf32>
    %72 = arith.mulf %71, %68 : vector<8x32xf32>
    %73 = arith.addf %70, %72 : vector<8x32xf32>
    %74 = vector.extract_strided_slice %66 {offsets = [0, 64], sizes = [8, 32], strides = [1, 1]} : vector<8x96xf32> to vector<8x32xf32>
    %75 = math.tanh %73 : vector<8x32xf32>
    %76 = arith.mulf %74, %75 : vector<8x32xf32>
    %c3_i32 = arith.constant 3 : i32
    %c8_i32_25 = arith.constant 8 : i32
    %77 = arith.muli %c3_i32, %c8_i32_25 : i32
    %78 = tpu.assume_multiple %77, 8 : i32
    %cst_26 = arith.constant dense<0.000000e+00> : vector<8x128xf32>
    %79 = tpu.matmul %76, %8, %cst_26 {dimension_numbers = #tpu.dot_dimension_numbers<[1], [0], [0], [1], [0, 0, 1, 1], [], []>} : vector<8x32xf32>, vector<32x128xf32>, vector<8x128xf32> -> vector<8x128xf32>
    %80 = arith.index_cast %78 : i32 to index
    %c0_27 = arith.constant 0 : index
    %81 = vector.load %arg19[%80, %c0_27] : memref<64x128xf32, #tpu.memory_space<vmem>>, vector<8x128xf32>
    %82 = arith.addf %79, %81 : vector<8x128xf32>
    %83 = vector.extract_strided_slice %82 {offsets = [0, 0], sizes = [8, 96], strides = [1, 1]} : vector<8x128xf32> to vector<8x96xf32>
    %84 = arith.negf %83 : vector<8x96xf32>
    %85 = math.exp %84 : vector<8x96xf32>
    %cst_28 = arith.constant 1.000000e+00 : f32
    %86 = vector.broadcast %cst_28 : f32 to vector<8x96xf32>
    %87 = arith.addf %86, %85 : vector<8x96xf32>
    %88 = arith.divf %86, %87 : vector<8x96xf32>
    %89 = vector.extract_strided_slice %82 {offsets = [0, 96], sizes = [8, 32], strides = [1, 1]} : vector<8x128xf32> to vector<8x32xf32>
    %90 = math.tanh %89 : vector<8x32xf32>
    %91 = vector.extract_strided_slice %88 {offsets = [0, 32], sizes = [8, 32], strides = [1, 1]} : vector<8x96xf32> to vector<8x32xf32>
    %92 = arith.mulf %91, %73 : vector<8x32xf32>
    %93 = vector.extract_strided_slice %88 {offsets = [0, 0], sizes = [8, 32], strides = [1, 1]} : vector<8x96xf32> to vector<8x32xf32>
    %94 = arith.mulf %93, %90 : vector<8x32xf32>
    %95 = arith.addf %92, %94 : vector<8x32xf32>
    %96 = vector.extract_strided_slice %88 {offsets = [0, 64], sizes = [8, 32], strides = [1, 1]} : vector<8x96xf32> to vector<8x32xf32>
    %97 = math.tanh %95 : vector<8x32xf32>
    %98 = arith.mulf %96, %97 : vector<8x32xf32>
    %c4_i32 = arith.constant 4 : i32
    %cst_29 = arith.constant dense<0.000000e+00> : vector<8x128xf32>
    %99 = tpu.matmul %98, %8, %cst_29 {dimension_numbers = #tpu.dot_dimension_numbers<[1], [0], [0], [1], [0, 0, 1, 1], [], []>} : vector<8x32xf32>, vector<32x128xf32>, vector<8x128xf32> -> vector<8x128xf32>
    %c32 = arith.constant 32 : index
    %c0_30 = arith.constant 0 : index
    %100 = vector.load %arg19[%c32, %c0_30] : memref<64x128xf32, #tpu.memory_space<vmem>>, vector<8x128xf32>
    %101 = arith.addf %99, %100 : vector<8x128xf32>
    %102 = vector.extract_strided_slice %101 {offsets = [0, 0], sizes = [8, 96], strides = [1, 1]} : vector<8x128xf32> to vector<8x96xf32>
    %103 = arith.negf %102 : vector<8x96xf32>
    %104 = math.exp %103 : vector<8x96xf32>
    %cst_31 = arith.constant 1.000000e+00 : f32
    %105 = vector.broadcast %cst_31 : f32 to vector<8x96xf32>
    %106 = arith.addf %105, %104 : vector<8x96xf32>
    %107 = arith.divf %105, %106 : vector<8x96xf32>
    %108 = vector.extract_strided_slice %101 {offsets = [0, 96], sizes = [8, 32], strides = [1, 1]} : vector<8x128xf32> to vector<8x32xf32>
    %109 = math.tanh %108 : vector<8x32xf32>
    %110 = vector.extract_strided_slice %107 {offsets = [0, 32], sizes = [8, 32], strides = [1, 1]} : vector<8x96xf32> to vector<8x32xf32>
    %111 = arith.mulf %110, %95 : vector<8x32xf32>
    %112 = vector.extract_strided_slice %107 {offsets = [0, 0], sizes = [8, 32], strides = [1, 1]} : vector<8x96xf32> to vector<8x32xf32>
    %113 = arith.mulf %112, %109 : vector<8x32xf32>
    %114 = arith.addf %111, %113 : vector<8x32xf32>
    %115 = vector.extract_strided_slice %107 {offsets = [0, 64], sizes = [8, 32], strides = [1, 1]} : vector<8x96xf32> to vector<8x32xf32>
    %116 = math.tanh %114 : vector<8x32xf32>
    %117 = arith.mulf %115, %116 : vector<8x32xf32>
    %c0_32 = arith.constant 0 : index
    %c0_33 = arith.constant 0 : index
    %c0_34 = arith.constant 0 : index
    %118 = vector.load %arg20[%c0_32, %c0_33, %c0_34] : memref<3x8x32xf32, #tpu.memory_space<vmem>>, vector<1x8x32xf32>
    %119 = vector.shape_cast %118 : vector<1x8x32xf32> to vector<8x32xf32>
    %120 = vector.shape_cast %117 : vector<8x32xf32> to vector<1x8x32xf32>
    tpu.vector_store %arg20[%c0_32, %c0_33, %c0_34], %120 {strides = array<i32>} : memref<3x8x32xf32, #tpu.memory_space<vmem>>, vector<1x8x32xf32>,
    %cst_35 = arith.constant dense<0.000000e+00> : vector<8x128xf32>
    %121 = tpu.matmul %117, %8, %cst_35 {dimension_numbers = #tpu.dot_dimension_numbers<[1], [0], [0], [1], [0, 0, 1, 1], [], []>} : vector<8x32xf32>, vector<32x128xf32>, vector<8x128xf32> -> vector<8x128xf32>
    %c40 = arith.constant 40 : index
    %c0_36 = arith.constant 0 : index
    %122 = vector.load %arg19[%c40, %c0_36] : memref<64x128xf32, #tpu.memory_space<vmem>>, vector<8x128xf32>
    %123 = arith.addf %121, %122 : vector<8x128xf32>
    %124 = vector.extract_strided_slice %123 {offsets = [0, 0], sizes = [8, 96], strides = [1, 1]} : vector<8x128xf32> to vector<8x96xf32>
    %125 = arith.negf %124 : vector<8x96xf32>
    %126 = math.exp %125 : vector<8x96xf32>
    %cst_37 = arith.constant 1.000000e+00 : f32
    %127 = vector.broadcast %cst_37 : f32 to vector<8x96xf32>
    %128 = arith.addf %127, %126 : vector<8x96xf32>
    %129 = arith.divf %127, %128 : vector<8x96xf32>
    %130 = vector.extract_strided_slice %123 {offsets = [0, 96], sizes = [8, 32], strides = [1, 1]} : vector<8x128xf32> to vector<8x32xf32>
    %131 = math.tanh %130 : vector<8x32xf32>
    %132 = vector.extract_strided_slice %129 {offsets = [0, 32], sizes = [8, 32], strides = [1, 1]} : vector<8x96xf32> to vector<8x32xf32>
    %133 = arith.mulf %132, %114 : vector<8x32xf32>
    %134 = vector.extract_strided_slice %129 {offsets = [0, 0], sizes = [8, 32], strides = [1, 1]} : vector<8x96xf32> to vector<8x32xf32>
    %135 = arith.mulf %134, %131 : vector<8x32xf32>
    %136 = arith.addf %133, %135 : vector<8x32xf32>
    %137 = vector.extract_strided_slice %129 {offsets = [0, 64], sizes = [8, 32], strides = [1, 1]} : vector<8x96xf32> to vector<8x32xf32>
    %138 = math.tanh %136 : vector<8x32xf32>
    %139 = arith.mulf %137, %138 : vector<8x32xf32>
    %c1 = arith.constant 1 : index
    %c0_38 = arith.constant 0 : index
    %c0_39 = arith.constant 0 : index
    %140 = vector.load %arg20[%c1, %c0_38, %c0_39] : memref<3x8x32xf32, #tpu.memory_space<vmem>>, vector<1x8x32xf32>
    %141 = vector.shape_cast %140 : vector<1x8x32xf32> to vector<8x32xf32>
    %142 = vector.shape_cast %139 : vector<8x32xf32> to vector<1x8x32xf32>
    tpu.vector_store %arg20[%c1, %c0_38, %c0_39], %142 {strides = array<i32>} : memref<3x8x32xf32, #tpu.memory_space<vmem>>, vector<1x8x32xf32>,
    %cst_40 = arith.constant dense<0.000000e+00> : vector<8x128xf32>
    %143 = tpu.matmul %139, %8, %cst_40 {dimension_numbers = #tpu.dot_dimension_numbers<[1], [0], [0], [1], [0, 0, 1, 1], [], []>} : vector<8x32xf32>, vector<32x128xf32>, vector<8x128xf32> -> vector<8x128xf32>
    %c48 = arith.constant 48 : index
    %c0_41 = arith.constant 0 : index
    %144 = vector.load %arg19[%c48, %c0_41] : memref<64x128xf32, #tpu.memory_space<vmem>>, vector<8x128xf32>
    %145 = arith.addf %143, %144 : vector<8x128xf32>
    %146 = vector.extract_strided_slice %145 {offsets = [0, 0], sizes = [8, 96], strides = [1, 1]} : vector<8x128xf32> to vector<8x96xf32>
    %147 = arith.negf %146 : vector<8x96xf32>
    %148 = math.exp %147 : vector<8x96xf32>
    %cst_42 = arith.constant 1.000000e+00 : f32
    %149 = vector.broadcast %cst_42 : f32 to vector<8x96xf32>
    %150 = arith.addf %149, %148 : vector<8x96xf32>
    %151 = arith.divf %149, %150 : vector<8x96xf32>
    %152 = vector.extract_strided_slice %145 {offsets = [0, 96], sizes = [8, 32], strides = [1, 1]} : vector<8x128xf32> to vector<8x32xf32>
    %153 = math.tanh %152 : vector<8x32xf32>
    %154 = vector.extract_strided_slice %151 {offsets = [0, 32], sizes = [8, 32], strides = [1, 1]} : vector<8x96xf32> to vector<8x32xf32>
    %155 = arith.mulf %154, %136 : vector<8x32xf32>
    %156 = vector.extract_strided_slice %151 {offsets = [0, 0], sizes = [8, 32], strides = [1, 1]} : vector<8x96xf32> to vector<8x32xf32>
    %157 = arith.mulf %156, %153 : vector<8x32xf32>
    %158 = arith.addf %155, %157 : vector<8x32xf32>
    %159 = vector.extract_strided_slice %151 {offsets = [0, 64], sizes = [8, 32], strides = [1, 1]} : vector<8x96xf32> to vector<8x32xf32>
    %160 = math.tanh %158 : vector<8x32xf32>
    %161 = arith.mulf %159, %160 : vector<8x32xf32>
    %c2 = arith.constant 2 : index
    %c0_43 = arith.constant 0 : index
    %c0_44 = arith.constant 0 : index
    %162 = vector.load %arg20[%c2, %c0_43, %c0_44] : memref<3x8x32xf32, #tpu.memory_space<vmem>>, vector<1x8x32xf32>
    %163 = vector.shape_cast %162 : vector<1x8x32xf32> to vector<8x32xf32>
    %164 = vector.shape_cast %161 : vector<8x32xf32> to vector<1x8x32xf32>
    tpu.vector_store %arg20[%c2, %c0_43, %c0_44], %164 {strides = array<i32>} : memref<3x8x32xf32, #tpu.memory_space<vmem>>, vector<1x8x32xf32>,
    %cst_45 = arith.constant dense<0.000000e+00> : vector<8x128xf32>
    %165 = tpu.matmul %161, %8, %cst_45 {dimension_numbers = #tpu.dot_dimension_numbers<[1], [0], [0], [1], [0, 0, 1, 1], [], []>} : vector<8x32xf32>, vector<32x128xf32>, vector<8x128xf32> -> vector<8x128xf32>
    %c56 = arith.constant 56 : index
    %c0_46 = arith.constant 0 : index
    %166 = vector.load %arg19[%c56, %c0_46] : memref<64x128xf32, #tpu.memory_space<vmem>>, vector<8x128xf32>
    %167 = arith.addf %165, %166 : vector<8x128xf32>
    %168 = vector.extract_strided_slice %167 {offsets = [0, 0], sizes = [8, 96], strides = [1, 1]} : vector<8x128xf32> to vector<8x96xf32>
    %169 = arith.negf %168 : vector<8x96xf32>
    %170 = math.exp %169 : vector<8x96xf32>
    %cst_47 = arith.constant 1.000000e+00 : f32
    %171 = vector.broadcast %cst_47 : f32 to vector<8x96xf32>
    %172 = arith.addf %171, %170 : vector<8x96xf32>
    %173 = arith.divf %171, %172 : vector<8x96xf32>
    %174 = vector.extract_strided_slice %167 {offsets = [0, 96], sizes = [8, 32], strides = [1, 1]} : vector<8x128xf32> to vector<8x32xf32>
    %175 = math.tanh %174 : vector<8x32xf32>
    %176 = vector.extract_strided_slice %173 {offsets = [0, 32], sizes = [8, 32], strides = [1, 1]} : vector<8x96xf32> to vector<8x32xf32>
    %177 = arith.mulf %176, %158 : vector<8x32xf32>
    %178 = vector.extract_strided_slice %173 {offsets = [0, 0], sizes = [8, 32], strides = [1, 1]} : vector<8x96xf32> to vector<8x32xf32>
    %179 = arith.mulf %178, %175 : vector<8x32xf32>
    %180 = arith.addf %177, %179 : vector<8x32xf32>
    %181 = vector.extract_strided_slice %173 {offsets = [0, 64], sizes = [8, 32], strides = [1, 1]} : vector<8x96xf32> to vector<8x32xf32>
    %182 = math.tanh %180 : vector<8x32xf32>
    %183 = arith.mulf %181, %182 : vector<8x32xf32>
    %c0_48 = arith.constant 0 : index
    %c0_49 = arith.constant 0 : index
    %184 = vector.load %arg9[%c0_48, %c0_49] : memref<32x32xf32, #tpu.memory_space<vmem>>, vector<32x32xf32>
    %cst_50 = arith.constant dense<0.000000e+00> : vector<8x32xf32>
    %185 = tpu.matmul %183, %184, %cst_50 {dimension_numbers = #tpu.dot_dimension_numbers<[1], [0], [0], [1], [0, 0, 1, 1], [], []>} : vector<8x32xf32>, vector<32x32xf32>, vector<8x32xf32> -> vector<8x32xf32>
    %c0_51 = arith.constant 0 : index
    %c0_52 = arith.constant 0 : index
    %c0_53 = arith.constant 0 : index
    %186 = vector.load %arg20[%c0_51, %c0_52, %c0_53] : memref<3x8x32xf32, #tpu.memory_space<vmem>>, vector<1x8x32xf32>
    %187 = vector.shape_cast %186 : vector<1x8x32xf32> to vector<8x32xf32>
    %c0_54 = arith.constant 0 : index
    %c0_55 = arith.constant 0 : index
    %188 = vector.load %arg7[%c0_54, %c0_55] : memref<32x32xf32, #tpu.memory_space<vmem>>, vector<32x32xf32>
    %cst_56 = arith.constant dense<0.000000e+00> : vector<8x32xf32>
    %189 = tpu.matmul %187, %188, %cst_56 {dimension_numbers = #tpu.dot_dimension_numbers<[1], [0], [0], [1], [0, 0, 1, 1], [], []>} : vector<8x32xf32>, vector<32x32xf32>, vector<8x32xf32> -> vector<8x32xf32>
    %190 = arith.addf %189, %185 : vector<8x32xf32>
    %191 = math.tanh %190 : vector<8x32xf32>
    %c0_57 = arith.constant 0 : index
    %c0_58 = arith.constant 0 : index
    %192 = vector.load %arg8[%c0_57, %c0_58] : memref<1x32xf32, #tpu.memory_space<vmem>>, vector<1x32xf32>
    %193 = vector.broadcast %192 : vector<1x32xf32> to vector<8x32xf32>
    %194 = arith.mulf %191, %193 : vector<8x32xf32>
    %cst_59 = arith.constant dense<0.000000e+00> : vector<8xf32>
    %195 = vector.multi_reduction <add>, %194, %cst_59 [1] : vector<8x32xf32> to vector<8xf32>
    %196 = vector.shape_cast %195 : vector<8xf32> to vector<8x1xf32>
    %c1_60 = arith.constant 1 : index
    %c0_61 = arith.constant 0 : index
    %c0_62 = arith.constant 0 : index
    %197 = vector.load %arg20[%c1_60, %c0_61, %c0_62] : memref<3x8x32xf32, #tpu.memory_space<vmem>>, vector<1x8x32xf32>
    %198 = vector.shape_cast %197 : vector<1x8x32xf32> to vector<8x32xf32>
    %c0_63 = arith.constant 0 : index
    %c0_64 = arith.constant 0 : index
    %199 = vector.load %arg7[%c0_63, %c0_64] : memref<32x32xf32, #tpu.memory_space<vmem>>, vector<32x32xf32>
    %cst_65 = arith.constant dense<0.000000e+00> : vector<8x32xf32>
    %200 = tpu.matmul %198, %199, %cst_65 {dimension_numbers = #tpu.dot_dimension_numbers<[1], [0], [0], [1], [0, 0, 1, 1], [], []>} : vector<8x32xf32>, vector<32x32xf32>, vector<8x32xf32> -> vector<8x32xf32>
    %201 = arith.addf %200, %185 : vector<8x32xf32>
    %202 = math.tanh %201 : vector<8x32xf32>
    %c0_66 = arith.constant 0 : index
    %c0_67 = arith.constant 0 : index
    %203 = vector.load %arg8[%c0_66, %c0_67] : memref<1x32xf32, #tpu.memory_space<vmem>>, vector<1x32xf32>
    %204 = vector.broadcast %203 : vector<1x32xf32> to vector<8x32xf32>
    %205 = arith.mulf %202, %204 : vector<8x32xf32>
    %cst_68 = arith.constant dense<0.000000e+00> : vector<8xf32>
    %206 = vector.multi_reduction <add>, %205, %cst_68 [1] : vector<8x32xf32> to vector<8xf32>
    %207 = vector.shape_cast %206 : vector<8xf32> to vector<8x1xf32>
    %c2_69 = arith.constant 2 : index
    %c0_70 = arith.constant 0 : index
    %c0_71 = arith.constant 0 : index
    %208 = vector.load %arg20[%c2_69, %c0_70, %c0_71] : memref<3x8x32xf32, #tpu.memory_space<vmem>>, vector<1x8x32xf32>
    %209 = vector.shape_cast %208 : vector<1x8x32xf32> to vector<8x32xf32>
    %c0_72 = arith.constant 0 : index
    %c0_73 = arith.constant 0 : index
    %210 = vector.load %arg7[%c0_72, %c0_73] : memref<32x32xf32, #tpu.memory_space<vmem>>, vector<32x32xf32>
    %cst_74 = arith.constant dense<0.000000e+00> : vector<8x32xf32>
    %211 = tpu.matmul %209, %210, %cst_74 {dimension_numbers = #tpu.dot_dimension_numbers<[1], [0], [0], [1], [0, 0, 1, 1], [], []>} : vector<8x32xf32>, vector<32x32xf32>, vector<8x32xf32> -> vector<8x32xf32>
    %212 = arith.addf %211, %185 : vector<8x32xf32>
    %213 = math.tanh %212 : vector<8x32xf32>
    %c0_75 = arith.constant 0 : index
    %c0_76 = arith.constant 0 : index
    %214 = vector.load %arg8[%c0_75, %c0_76] : memref<1x32xf32, #tpu.memory_space<vmem>>, vector<1x32xf32>
    %215 = vector.broadcast %214 : vector<1x32xf32> to vector<8x32xf32>
    %216 = arith.mulf %213, %215 : vector<8x32xf32>
    %cst_77 = arith.constant dense<0.000000e+00> : vector<8xf32>
    %217 = vector.multi_reduction <add>, %216, %cst_77 [1] : vector<8x32xf32> to vector<8xf32>
    %218 = vector.shape_cast %217 : vector<8xf32> to vector<8x1xf32>
    %219 = tpu.concatenate %196, %207, %218 in 1 : vector<8x1xf32>, vector<8x1xf32>, vector<8x1xf32> -> vector<8x3xf32>
    %cst_78 = arith.constant dense<0xFF800000> : vector<8xf32>
    %220 = vector.multi_reduction <maximumf>, %219, %cst_78 [1] : vector<8x3xf32> to vector<8xf32>
    %221 = vector.shape_cast %220 : vector<8xf32> to vector<8x1xf32>
    %222 = vector.broadcast %221 : vector<8x1xf32> to vector<8x3xf32>
    %223 = arith.subf %219, %222 : vector<8x3xf32>
    %224 = math.exp %223 : vector<8x3xf32>
    %cst_79 = arith.constant dense<0.000000e+00> : vector<8xf32>
    %225 = vector.multi_reduction <add>, %224, %cst_79 [1] : vector<8x3xf32> to vector<8xf32>
    %226 = vector.shape_cast %225 : vector<8xf32> to vector<8x1xf32>
    %227 = math.log %226 : vector<8x1xf32>
    %228 = vector.broadcast %221 : vector<8x1xf32> to vector<8x3xf32>
    %229 = arith.subf %219, %228 : vector<8x3xf32>
    %230 = vector.broadcast %227 : vector<8x1xf32> to vector<8x3xf32>
    %231 = arith.subf %229, %230 : vector<8x3xf32>
    %232 = vector.extract_strided_slice %231 {offsets = [0, 0], sizes = [8, 1], strides = [1, 1]} : vector<8x3xf32> to vector<8x1xf32>
    %c0_80 = arith.constant 0 : index
    %c0_81 = arith.constant 0 : index
    %c0_82 = arith.constant 0 : index
    %233 = vector.load %arg20[%c0_80, %c0_81, %c0_82] : memref<3x8x32xf32, #tpu.memory_space<vmem>>, vector<1x8x32xf32>
    %234 = vector.shape_cast %233 : vector<1x8x32xf32> to vector<8x32xf32>
    %235 = vector.broadcast %232 : vector<8x1xf32> to vector<8x32xf32>
    %236 = arith.mulf %235, %234 : vector<8x32xf32>
    %237 = vector.extract_strided_slice %231 {offsets = [0, 1], sizes = [8, 1], strides = [1, 1]} : vector<8x3xf32> to vector<8x1xf32>
    %c1_83 = arith.constant 1 : index
    %c0_84 = arith.constant 0 : index
    %c0_85 = arith.constant 0 : index
    %238 = vector.load %arg20[%c1_83, %c0_84, %c0_85] : memref<3x8x32xf32, #tpu.memory_space<vmem>>, vector<1x8x32xf32>
    %239 = vector.shape_cast %238 : vector<1x8x32xf32> to vector<8x32xf32>
    %240 = vector.broadcast %237 : vector<8x1xf32> to vector<8x32xf32>
    %241 = arith.mulf %240, %239 : vector<8x32xf32>
    %242 = arith.addf %236, %241 : vector<8x32xf32>
    %243 = vector.extract_strided_slice %231 {offsets = [0, 2], sizes = [8, 1], strides = [1, 1]} : vector<8x3xf32> to vector<8x1xf32>
    %c2_86 = arith.constant 2 : index
    %c0_87 = arith.constant 0 : index
    %c0_88 = arith.constant 0 : index
    %244 = vector.load %arg20[%c2_86, %c0_87, %c0_88] : memref<3x8x32xf32, #tpu.memory_space<vmem>>, vector<1x8x32xf32>
    %245 = vector.shape_cast %244 : vector<1x8x32xf32> to vector<8x32xf32>
    %246 = vector.broadcast %243 : vector<8x1xf32> to vector<8x32xf32>
    %247 = arith.mulf %246, %245 : vector<8x32xf32>
    %248 = arith.addf %242, %247 : vector<8x32xf32>
    %c0_89 = arith.constant 0 : index
    %c0_90 = arith.constant 0 : index
    %249 = vector.load %arg10[%c0_89, %c0_90] : memref<32x32xf32, #tpu.memory_space<vmem>>, vector<32x32xf32>
    %cst_91 = arith.constant dense<0.000000e+00> : vector<8x32xf32>
    %250 = tpu.matmul %183, %249, %cst_91 {dimension_numbers = #tpu.dot_dimension_numbers<[1], [0], [0], [1], [0, 0, 1, 1], [], []>} : vector<8x32xf32>, vector<32x32xf32>, vector<8x32xf32> -> vector<8x32xf32>
    %c0_92 = arith.constant 0 : index
    %c0_93 = arith.constant 0 : index
    %251 = vector.load %arg11[%c0_92, %c0_93] : memref<32x32xf32, #tpu.memory_space<vmem>>, vector<32x32xf32>
    %cst_94 = arith.constant dense<0.000000e+00> : vector<8x32xf32>
    %252 = tpu.matmul %248, %251, %cst_94 {dimension_numbers = #tpu.dot_dimension_numbers<[1], [0], [0], [1], [0, 0, 1, 1], [], []>} : vector<8x32xf32>, vector<32x32xf32>, vector<8x32xf32> -> vector<8x32xf32>
    %253 = arith.addf %250, %252 : vector<8x32xf32>
    %254 = math.tanh %253 : vector<8x32xf32>
    %c0_95 = arith.constant 0 : index
    %c0_96 = arith.constant 0 : index
    %255 = vector.load %arg12[%c0_95, %c0_96] : memref<32x128xf32, #tpu.memory_space<vmem>>, vector<32x128xf32>
    %cst_97 = arith.constant dense<0.000000e+00> : vector<8x128xf32>
    %256 = tpu.matmul %254, %255, %cst_97 {dimension_numbers = #tpu.dot_dimension_numbers<[1], [0], [0], [1], [0, 0, 1, 1], [], []>} : vector<8x32xf32>, vector<32x128xf32>, vector<8x128xf32> -> vector<8x128xf32>
    %c0_98 = arith.constant 0 : index
    %c0_99 = arith.constant 0 : index
    %257 = vector.load %arg13[%c0_98, %c0_99] : memref<1x128xf32, #tpu.memory_space<vmem>>, vector<1x128xf32>
    %258 = vector.broadcast %257 : vector<1x128xf32> to vector<8x128xf32>
    %259 = arith.addf %256, %258 : vector<8x128xf32>
    %cst_100 = arith.constant dense<0xFF800000> : vector<8xf32>
    %260 = vector.multi_reduction <maximumf>, %259, %cst_100 [1] : vector<8x128xf32> to vector<8xf32>
    %261 = vector.shape_cast %260 : vector<8xf32> to vector<8x1xf32>
    %262 = vector.broadcast %261 : vector<8x1xf32> to vector<8x128xf32>
    %263 = arith.subf %259, %262 : vector<8x128xf32>
    %264 = math.exp %263 : vector<8x128xf32>
    %cst_101 = arith.constant dense<0.000000e+00> : vector<8xf32>
    %265 = vector.multi_reduction <add>, %264, %cst_101 [1] : vector<8x128xf32> to vector<8xf32>
    %266 = vector.shape_cast %265 : vector<8xf32> to vector<8x1xf32>
    %267 = math.log %266 : vector<8x1xf32>
    %268 = vector.broadcast %261 : vector<8x1xf32> to vector<8x128xf32>
    %269 = arith.subf %259, %268 : vector<8x128xf32>
    %270 = vector.broadcast %267 : vector<8x1xf32> to vector<8x128xf32>
    %271 = arith.subf %269, %270 : vector<8x128xf32>
    %c0_102 = arith.constant 0 : index
    %c0_103 = arith.constant 0 : index
    %272 = vector.load %arg14[%c0_102, %c0_103] : memref<1x32xf32, #tpu.memory_space<vmem>>, vector<1x32xf32>
    %273 = vector.broadcast %272 : vector<1x32xf32> to vector<8x32xf32>
    %274 = arith.mulf %183, %273 : vector<8x32xf32>
    %cst_104 = arith.constant dense<0.000000e+00> : vector<8xf32>
    %275 = vector.multi_reduction <add>, %274, %cst_104 [1] : vector<8x32xf32> to vector<8xf32>
    %276 = vector.shape_cast %275 : vector<8xf32> to vector<8x1xf32>
    %c0_105 = arith.constant 0 : index
    %c0_106 = arith.constant 0 : index
    %277 = vector.load %arg15[%c0_105, %c0_106] : memref<1x32xf32, #tpu.memory_space<vmem>>, vector<1x32xf32>
    %278 = vector.broadcast %277 : vector<1x32xf32> to vector<8x32xf32>
    %279 = arith.mulf %248, %278 : vector<8x32xf32>
    %cst_107 = arith.constant dense<0.000000e+00> : vector<8xf32>
    %280 = vector.multi_reduction <add>, %279, %cst_107 [1] : vector<8x32xf32> to vector<8xf32>
    %281 = vector.shape_cast %280 : vector<8xf32> to vector<8x1xf32>
    %282 = arith.addf %276, %281 : vector<8x1xf32>
    %c0_108 = arith.constant 0 : index
    %c0_109 = arith.constant 0 : index
    %283 = vector.load %arg16[%c0_108, %c0_109] : memref<1x1xf32, #tpu.memory_space<vmem>>, vector<1x1xf32>
    %284 = vector.broadcast %283 : vector<1x1xf32> to vector<8x1xf32>
    %285 = arith.addf %282, %284 : vector<8x1xf32>
    %286 = arith.negf %285 : vector<8x1xf32>
    %287 = math.exp %286 : vector<8x1xf32>
    %cst_110 = arith.constant 1.000000e+00 : f32
    %288 = vector.broadcast %cst_110 : f32 to vector<8x1xf32>
    %289 = arith.addf %288, %287 : vector<8x1xf32>
    %290 = arith.divf %288, %289 : vector<8x1xf32>
    %cst_111 = arith.constant 1.000000e+00 : f32
    %291 = vector.broadcast %cst_111 : f32 to vector<8x1xf32>
    %292 = arith.subf %291, %290 : vector<8x1xf32>
    %293 = vector.broadcast %292 : vector<8x1xf32> to vector<8x3xf32>
    %294 = arith.mulf %293, %231 : vector<8x3xf32>
    %c0_112 = arith.constant 0 : index
    %c0_113 = arith.constant 0 : index
    %295 = vector.load %arg17[%c0_112, %c0_113] : memref<3x128xf32, #tpu.memory_space<vmem>>, vector<3x128xf32>
    %cst_114 = arith.constant dense<0.000000e+00> : vector<8x128xf32>
    %296 = tpu.matmul %294, %295, %cst_114 {dimension_numbers = #tpu.dot_dimension_numbers<[1], [0], [0], [1], [0, 0, 1, 1], [], []>} : vector<8x3xf32>, vector<3x128xf32>, vector<8x128xf32> -> vector<8x128xf32>
    %297 = tpu.iota {dimensions = array<i32: 1>} : vector<8x128xi32>
    %c40_i32 = arith.constant 40 : i32
    %298 = vector.broadcast %c40_i32 : i32 to vector<8x128xi32>
    %299 = arith.cmpi slt, %297, %298 : vector<8x128xi32>
    %300 = vector.broadcast %290 : vector<8x1xf32> to vector<8x128xf32>
    %301 = arith.mulf %300, %271 : vector<8x128xf32>
    %302 = arith.select %299, %301, %296 : vector<8x128xi1>, vector<8x128xf32>
    %c0_115 = arith.constant 0 : index
    %c0_116 = arith.constant 0 : index
    %303 = vector.load %arg18[%c0_115, %c0_116] : memref<8x128xf32, #tpu.memory_space<vmem>>, vector<8x128xf32>
    tpu.vector_store %arg18[%c0_115, %c0_116], %302 {strides = array<i32>} : memref<8x128xf32, #tpu.memory_space<vmem>>, vector<8x128xf32>,
    return
  }
  func.func @transform_0(%arg0: i32) -> (i32, i32, i32) {
    %c0_i32 = arith.constant 0 : i32
    %c0_i32_0 = arith.constant 0 : i32
    %c0_i32_1 = arith.constant 0 : i32
    return %c0_i32, %arg0, %c0_i32_0 : i32, i32, i32
  }
  func.func @transform_1(%arg0: i32) -> (i32, i32) {
    %c0_i32 = arith.constant 0 : i32
    %c0_i32_0 = arith.constant 0 : i32
    return %arg0, %c0_i32 : i32, i32
  }
  func.func @transform_2(%arg0: i32) -> (i32, i32) {
    %c0_i32 = arith.constant 0 : i32
    %c0_i32_0 = arith.constant 0 : i32
    return %arg0, %c0_i32 : i32, i32
  }
  func.func @transform_3(%arg0: i32) -> (i32, i32) {
    %c0_i32 = arith.constant 0 : i32
    %c0_i32_0 = arith.constant 0 : i32
    %c0_i32_1 = arith.constant 0 : i32
    return %c0_i32, %c0_i32_0 : i32, i32
  }
  func.func @transform_4(%arg0: i32) -> (i32, i32) {
    %c0_i32 = arith.constant 0 : i32
    %c0_i32_0 = arith.constant 0 : i32
    %c0_i32_1 = arith.constant 0 : i32
    return %c0_i32, %c0_i32_0 : i32, i32
  }
  func.func @transform_5(%arg0: i32) -> (i32, i32) {
    %c0_i32 = arith.constant 0 : i32
    %c0_i32_0 = arith.constant 0 : i32
    %c0_i32_1 = arith.constant 0 : i32
    return %c0_i32, %c0_i32_0 : i32, i32
  }
  func.func @transform_6(%arg0: i32) -> (i32, i32) {
    %c0_i32 = arith.constant 0 : i32
    %c0_i32_0 = arith.constant 0 : i32
    %c0_i32_1 = arith.constant 0 : i32
    return %c0_i32, %c0_i32_0 : i32, i32
  }
  func.func @transform_7(%arg0: i32) -> (i32, i32) {
    %c0_i32 = arith.constant 0 : i32
    %c0_i32_0 = arith.constant 0 : i32
    %c0_i32_1 = arith.constant 0 : i32
    return %c0_i32, %c0_i32_0 : i32, i32
  }
  func.func @transform_8(%arg0: i32) -> (i32, i32) {
    %c0_i32 = arith.constant 0 : i32
    %c0_i32_0 = arith.constant 0 : i32
    %c0_i32_1 = arith.constant 0 : i32
    return %c0_i32, %c0_i32_0 : i32, i32
  }
  func.func @transform_9(%arg0: i32) -> (i32, i32) {
    %c0_i32 = arith.constant 0 : i32
    %c0_i32_0 = arith.constant 0 : i32
    %c0_i32_1 = arith.constant 0 : i32
    return %c0_i32, %c0_i32_0 : i32, i32
  }
  func.func @transform_10(%arg0: i32) -> (i32, i32) {
    %c0_i32 = arith.constant 0 : i32
    %c0_i32_0 = arith.constant 0 : i32
    %c0_i32_1 = arith.constant 0 : i32
    return %c0_i32, %c0_i32_0 : i32, i32
  }
  func.func @transform_11(%arg0: i32) -> (i32, i32) {
    %c0_i32 = arith.constant 0 : i32
    %c0_i32_0 = arith.constant 0 : i32
    %c0_i32_1 = arith.constant 0 : i32
    return %c0_i32, %c0_i32_0 : i32, i32
  }
  func.func @transform_12(%arg0: i32) -> (i32, i32) {
    %c0_i32 = arith.constant 0 : i32
    %c0_i32_0 = arith.constant 0 : i32
    %c0_i32_1 = arith.constant 0 : i32
    return %c0_i32, %c0_i32_0 : i32, i32
  }
  func.func @transform_13(%arg0: i32) -> (i32, i32) {
    %c0_i32 = arith.constant 0 : i32
    %c0_i32_0 = arith.constant 0 : i32
    %c0_i32_1 = arith.constant 0 : i32
    return %c0_i32, %c0_i32_0 : i32, i32
  }
  func.func @transform_14(%arg0: i32) -> (i32, i32) {
    %c0_i32 = arith.constant 0 : i32
    %c0_i32_0 = arith.constant 0 : i32
    %c0_i32_1 = arith.constant 0 : i32
    return %c0_i32, %c0_i32_0 : i32, i32
  }
  func.func @transform_15(%arg0: i32) -> (i32, i32) {
    %c0_i32 = arith.constant 0 : i32
    %c0_i32_0 = arith.constant 0 : i32
    %c0_i32_1 = arith.constant 0 : i32
    return %c0_i32, %c0_i32_0 : i32, i32
  }
  func.func @transform_16(%arg0: i32) -> (i32, i32) {
    %c0_i32 = arith.constant 0 : i32
    %c0_i32_0 = arith.constant 0 : i32
    %c0_i32_1 = arith.constant 0 : i32
    return %c0_i32, %c0_i32_0 : i32, i32
  }
  func.func @transform_17(%arg0: i32) -> (i32, i32) {
    %c0_i32 = arith.constant 0 : i32
    %c0_i32_0 = arith.constant 0 : i32
    return %arg0, %c0_i32 : i32, i32
  }
}

</mosaic_0001>

<llo_original>
// kernel: main_model_forward.1
$region0: #{main_model_forward.1}
  #allocation0 [shape = 'u32[]', space=smem, size = 0x4, offset = 0x4, fixed_abs, tag = 'smem constant byte address 0x4 - core index']
  #allocation1 [shape = 'u32[72,128]{1,0:T(1,128)}', space=vmem, size = 0x9000, scoped, tag = 'internal scratch']
  #allocation2 [shape = 'f32[64,128]{1,0:T(8,128)}', space=vmem, size = 0x8000, scoped, tag = 'scratch operand']
  #allocation3 [shape = 'f32[3,8,32]{2,1,0:T(8,128)}', space=vmem, size = 0x3000, scoped, tag = 'scratch operand']
  #allocation4 [shape = 'f32[1,1]{1,0:T(1,128)S(1)}', space=vmem, size = 0x200, scoped, tag = 'scoped memory for main_model_forward.1']
  %s0 = inlined_call_operand.vmem [shape: f32[8,16,32], index: 0, kind: input, shape index: {}]
  %s1 = inlined_call_operand.vmem [shape: f32[16,32], index: 1, kind: input, shape index: {}]
  %s2 = inlined_call_operand.vmem [shape: f32[16,32], index: 2, kind: input, shape index: {}]
  %s3 = inlined_call_operand.vmem [shape: f32[32,128], index: 3, kind: input, shape index: {}]
  %s4 = inlined_call_operand.vmem [shape: f32[32,128], index: 4, kind: input, shape index: {}]
  %s5 = inlined_call_operand.vmem [shape: f32[1,128], index: 5, kind: input, shape index: {}]
  %s6 = inlined_call_operand.vmem [shape: f32[32,32], index: 6, kind: input, shape index: {}]
  %s7 = inlined_call_operand.vmem [shape: f32[1,32], index: 7, kind: input, shape index: {}]
  %s8 = inlined_call_operand.vmem [shape: f32[32,32], index: 8, kind: input, shape index: {}]
  %s9 = inlined_call_operand.vmem [shape: f32[32,32], index: 9, kind: input, shape index: {}]
  %s10 = inlined_call_operand.vmem [shape: f32[32,32], index: 10, kind: input, shape index: {}]
  %s11 = inlined_call_operand.vmem [shape: f32[32,128], index: 11, kind: input, shape index: {}]
  %s12 = inlined_call_operand.vmem [shape: f32[1,128], index: 12, kind: input, shape index: {}]
  %s13 = inlined_call_operand.vmem [shape: f32[1,32], index: 13, kind: input, shape index: {}]
  %s14 = inlined_call_operand.vmem [shape: f32[1,32], index: 14, kind: input, shape index: {}]
  %s15 = inlined_call_operand.<no memory space> [shape: f32[1,1], index: 15, kind: input, shape index: {}]
  %s16 = inlined_call_operand.vmem [shape: f32[3,128], index: 16, kind: input, shape index: {}]
  %s17 = inlined_call_operand.hbm [shape: f32[16,128], index: 17, kind: output, shape index: {}]
  %s18 = sld [smem:[#allocation0]]
  $region139: #{main_model_forward.1} parent=0
    _
  %s20 = ssub.s32 1, %s18
  %s21 = scalar_select 0, %s20, %s18
  %v22 = vstv %s15
  %23 = vst [vmem:[#allocation4] sm:$0x1] %v22
  $region1: #{main_model_forward.1} parent=0
    #allocation5 [shape = 'u8[65536]{0}', space=vmem, size = 0x10000, scoped, tag = 'input window, operand 0']
    #allocation6 [shape = 'u8[8192]{0}', space=vmem, size = 0x2000, scoped, tag = 'output window, operand 0']
    #allocation7 [shape = 's32[2]{0}', space=sflag, size = 0x8, scoped, tag = 'scoped memory for main_model_forward.1']
    %24 = vsyncpa [#allocation7], 0
    %s25 = scalar_lea.sflag [#allocation7], 1
    %26 = vsyncpa %s25, 0
    loop: start=0, step=1, limit=4
    $region2: #{main_model_forward.1} parent=1 // loop_pre_header
      _
    $region3: #{main_model_forward.1} parent=1 // loop_header
      %s28 = sphi 0, %s32
      %p29 = scmp.ge.s32.totalorder %s28, 4
      %s38 = sphi 0, %s40
      %s41 = sphi 0, %s38
      %s42 = sphi 0, %s41
      %s58 = sphi 0, %s42
      %s64 = sphi 0, %s66
      %s67 = sphi 0, %s64
      %s68 = sphi 0, %s67
      %s84 = sphi 0, %s68
      %s90 = sphi 0, %s92
      %s93 = sphi 0, %s90
      %s94 = sphi 0, %s93
      %s110 = sphi 0, %s94
      %s114 = sphi 0, %s114
      %s116 = sphi 0, %s114
      %s117 = sphi 0, %s116
      %s131 = sphi 0, %s117
      %s135 = sphi 0, %s135
      %s137 = sphi 0, %s135
      %s138 = sphi 0, %s137
      %s152 = sphi 0, %s138
      %s156 = sphi 0, %s156
      %s158 = sphi 0, %s156
      %s159 = sphi 0, %s158
      %s173 = sphi 0, %s159
      %s177 = sphi 0, %s177
      %s179 = sphi 0, %s177
      %s180 = sphi 0, %s179
      %s194 = sphi 0, %s180
      %s198 = sphi 0, %s198
      %s200 = sphi 0, %s198
      %s201 = sphi 0, %s200
      %s215 = sphi 0, %s201
      %s219 = sphi 0, %s219
      %s221 = sphi 0, %s219
      %s222 = sphi 0, %s221
      %s236 = sphi 0, %s222
      %s240 = sphi 0, %s240
      %s242 = sphi 0, %s240
      %s243 = sphi 0, %s242
      %s257 = sphi 0, %s243
      %s261 = sphi 0, %s261
      %s263 = sphi 0, %s261
      %s264 = sphi 0, %s263
      %s278 = sphi 0, %s264
      %s282 = sphi 0, %s282
      %s284 = sphi 0, %s282
      %s285 = sphi 0, %s284
      %s299 = sphi 0, %s285
      %s303 = sphi 0, %s303
      %s305 = sphi 0, %s303
      %s306 = sphi 0, %s305
      %s320 = sphi 0, %s306
      %s324 = sphi 0, %s324
      %s326 = sphi 0, %s324
      %s327 = sphi 0, %s326
      %s341 = sphi 0, %s327
      %s345 = sphi 0, %s345
      %s347 = sphi 0, %s345
      %s348 = sphi 0, %s347
      %s362 = sphi 0, %s348
      %s366 = sphi 0, %s366
      %s368 = sphi 0, %s366
      %s369 = sphi 0, %s368
      %s383 = sphi 0, %s369
      %s387 = sphi 0, %s387
      %s389 = sphi 0, %s387
      %s390 = sphi 0, %s389
      %s404 = sphi 0, %s390
      %s410 = sphi 0, %s412
      %s413 = sphi 0, %s410
      %s414 = sphi 0, %s413
      %s430 = sphi 0, %s414
    $region4: #{main_model_forward.1} parent=1 // loop_header_branch
      %31 = sbr.rel (%p29) target = $region8
    $region5: #{main_model_forward.1} parent=1 // loop_body
      %s33 = ssub.s32 %s28, 1
      %s34 = ssub.s32 %s28, 2
      %s35 = sadd.s32 %s28, 1
      %s36 = ssub.s32 %s28, %s35
      %p37 = scmp.eq.s32.totalorder %s36, 0
      %s39 = sadd.s32 %s38, 1
      %s40 = scalar_select %p37, %s38, %s39
      %p43 = pneg %p37
      %p44 = scmp.eq.s32.totalorder %s28, 1
      %p45 = por %p43, %p44
      %p46 = scmp.ne.s32.totalorder %s38, %s41
      %p47 = scmp.eq.s32.totalorder %s28, 0
      %p48 = por %p46, %p47
      %p49 = scmp.ne.s32.totalorder %s38, %s41
      %p50 = scmp.eq.s32.totalorder %s33, 1
      %p51 = por %p49, %p50
      %p52 = scmp.ne.s32.totalorder %s41, %s42
      %p53 = scmp.eq.s32.totalorder %s33, 0
      %p54 = por %p52, %p53
      %p55 = scmp.ne.s32.totalorder %s41, %s42
      %p56 = scmp.eq.s32.totalorder %s34, 1
      %p57 = por %p55, %p56
      %p59 = scmp.ne.s32.totalorder %s42, %s58
      %p60 = scmp.eq.s32.totalorder %s34, 0
      %p61 = por %p59, %p60
      %s62 = ssub.s32 %s28, %s35
      %p63 = scmp.eq.s32.totalorder %s62, 0
      %s65 = sadd.s32 %s64, 1
      %s66 = scalar_select %p63, %s64, %s65
      %p69 = pneg %p63
      %p70 = scmp.eq.s32.totalorder %s28, 1
      %p71 = por %p69, %p70
      %p72 = scmp.ne.s32.totalorder %s64, %s67
      %p73 = scmp.eq.s32.totalorder %s28, 0
      %p74 = por %p72, %p73
      %p75 = scmp.ne.s32.totalorder %s64, %s67
      %p76 = scmp.eq.s32.totalorder %s33, 1
      %p77 = por %p75, %p76
      %p78 = scmp.ne.s32.totalorder %s67, %s68
      %p79 = scmp.eq.s32.totalorder %s33, 0
      %p80 = por %p78, %p79
      %p81 = scmp.ne.s32.totalorder %s67, %s68
      %p82 = scmp.eq.s32.totalorder %s34, 1
      %p83 = por %p81, %p82
      %p85 = scmp.ne.s32.totalorder %s68, %s84
      %p86 = scmp.eq.s32.totalorder %s34, 0
      %p87 = por %p85, %p86
      %s88 = ssub.s32 %s28, %s35
      %p89 = scmp.eq.s32.totalorder %s88, 0
      %s91 = sadd.s32 %s90, 1
      %s92 = scalar_select %p89, %s90, %s91
      %p95 = pneg %p89
      %p96 = scmp.eq.s32.totalorder %s28, 1
      %p97 = por %p95, %p96
      %p98 = scmp.ne.s32.totalorder %s90, %s93
      %p99 = scmp.eq.s32.totalorder %s28, 0
      %p100 = por %p98, %p99
      %p101 = scmp.ne.s32.totalorder %s90, %s93
      %p102 = scmp.eq.s32.totalorder %s33, 1
      %p103 = por %p101, %p102
      %p104 = scmp.ne.s32.totalorder %s93, %s94
      %p105 = scmp.eq.s32.totalorder %s33, 0
      %p106 = por %p104, %p105
      %p107 = scmp.ne.s32.totalorder %s93, %s94
      %p108 = scmp.eq.s32.totalorder %s34, 1
      %p109 = por %p107, %p108
      %p111 = scmp.ne.s32.totalorder %s94, %s110
      %p112 = scmp.eq.s32.totalorder %s34, 0
      %p113 = por %p111, %p112
      %s115 = sadd.s32 %s114, 1
      %p118 = scmp.eq.s32.totalorder %s28, 1
      %p119 = scmp.ne.s32.totalorder %s114, %s116
      %p120 = scmp.eq.s32.totalorder %s28, 0
      %p121 = por %p119, %p120
      %p122 = scmp.ne.s32.totalorder %s114, %s116
      %p123 = scmp.eq.s32.totalorder %s33, 1
      %p124 = por %p122, %p123
      %p125 = scmp.ne.s32.totalorder %s116, %s117
      %p126 = scmp.eq.s32.totalorder %s33, 0
      %p127 = por %p125, %p126
      %p128 = scmp.ne.s32.totalorder %s116, %s117
      %p129 = scmp.eq.s32.totalorder %s34, 1
      %p130 = por %p128, %p129
      %p132 = scmp.ne.s32.totalorder %s117, %s131
      %p133 = scmp.eq.s32.totalorder %s34, 0
      %p134 = por %p132, %p133
      %s136 = sadd.s32 %s135, 1
      %p139 = scmp.eq.s32.totalorder %s28, 1
      %p140 = scmp.ne.s32.totalorder %s135, %s137
      %p141 = scmp.eq.s32.totalorder %s28, 0
      %p142 = por %p140, %p141
      %p143 = scmp.ne.s32.totalorder %s135, %s137
      %p144 = scmp.eq.s32.totalorder %s33, 1
      %p145 = por %p143, %p144
      %p146 = scmp.ne.s32.totalorder %s137, %s138
      %p147 = scmp.eq.s32.totalorder %s33, 0
      %p148 = por %p146, %p147
      %p149 = scmp.ne.s32.totalorder %s137, %s138
      %p150 = scmp.eq.s32.totalorder %s34, 1
      %p151 = por %p149, %p150
      %p153 = scmp.ne.s32.totalorder %s138, %s152
      %p154 = scmp.eq.s32.totalorder %s34, 0
      %p155 = por %p153, %p154
      %s157 = sadd.s32 %s156, 1
      %p160 = scmp.eq.s32.totalorder %s28, 1
      %p161 = scmp.ne.s32.totalorder %s156, %s158
      %p162 = scmp.eq.s32.totalorder %s28, 0
      %p163 = por %p161, %p162
      %p164 = scmp.ne.s32.totalorder %s156, %s158
      %p165 = scmp.eq.s32.totalorder %s33, 1
      %p166 = por %p164, %p165
      %p167 = scmp.ne.s32.totalorder %s158, %s159
      %p168 = scmp.eq.s32.totalorder %s33, 0
      %p169 = por %p167, %p168
      %p170 = scmp.ne.s32.totalorder %s158, %s159
      %p171 = scmp.eq.s32.totalorder %s34, 1
      %p172 = por %p170, %p171
      %p174 = scmp.ne.s32.totalorder %s159, %s173
      %p175 = scmp.eq.s32.totalorder %s34, 0
      %p176 = por %p174, %p175
      %s178 = sadd.s32 %s177, 1
      %p181 = scmp.eq.s32.totalorder %s28, 1
      %p182 = scmp.ne.s32.totalorder %s177, %s179
      %p183 = scmp.eq.s32.totalorder %s28, 0
      %p184 = por %p182, %p183
      %p185 = scmp.ne.s32.totalorder %s177, %s179
      %p186 = scmp.eq.s32.totalorder %s33, 1
      %p187 = por %p185, %p186
      %p188 = scmp.ne.s32.totalorder %s179, %s180
      %p189 = scmp.eq.s32.totalorder %s33, 0
      %p190 = por %p188, %p189
      %p191 = scmp.ne.s32.totalorder %s179, %s180
      %p192 = scmp.eq.s32.totalorder %s34, 1
      %p193 = por %p191, %p192
      %p195 = scmp.ne.s32.totalorder %s180, %s194
      %p196 = scmp.eq.s32.totalorder %s34, 0
      %p197 = por %p195, %p196
      %s199 = sadd.s32 %s198, 1
      %p202 = scmp.eq.s32.totalorder %s28, 1
      %p203 = scmp.ne.s32.totalorder %s198, %s200
      %p204 = scmp.eq.s32.totalorder %s28, 0
      %p205 = por %p203, %p204
      %p206 = scmp.ne.s32.totalorder %s198, %s200
      %p207 = scmp.eq.s32.totalorder %s33, 1
      %p208 = por %p206, %p207
      %p209 = scmp.ne.s32.totalorder %s200, %s201
      %p210 = scmp.eq.s32.totalorder %s33, 0
      %p211 = por %p209, %p210
      %p212 = scmp.ne.s32.totalorder %s200, %s201
      %p213 = scmp.eq.s32.totalorder %s34, 1
      %p214 = por %p212, %p213
      %p216 = scmp.ne.s32.totalorder %s201, %s215
      %p217 = scmp.eq.s32.totalorder %s34, 0
      %p218 = por %p216, %p217
      %s220 = sadd.s32 %s219, 1
      %p223 = scmp.eq.s32.totalorder %s28, 1
      %p224 = scmp.ne.s32.totalorder %s219, %s221
      %p225 = scmp.eq.s32.totalorder %s28, 0
      %p226 = por %p224, %p225
      %p227 = scmp.ne.s32.totalorder %s219, %s221
      %p228 = scmp.eq.s32.totalorder %s33, 1
      %p229 = por %p227, %p228
      %p230 = scmp.ne.s32.totalorder %s221, %s222
      %p231 = scmp.eq.s32.totalorder %s33, 0
      %p232 = por %p230, %p231
      %p233 = scmp.ne.s32.totalorder %s221, %s222
      %p234 = scmp.eq.s32.totalorder %s34, 1
      %p235 = por %p233, %p234
      %p237 = scmp.ne.s32.totalorder %s222, %s236
      %p238 = scmp.eq.s32.totalorder %s34, 0
      %p239 = por %p237, %p238
      %s241 = sadd.s32 %s240, 1
      %p244 = scmp.eq.s32.totalorder %s28, 1
      %p245 = scmp.ne.s32.totalorder %s240, %s242
      %p246 = scmp.eq.s32.totalorder %s28, 0
      %p247 = por %p245, %p246
      %p248 = scmp.ne.s32.totalorder %s240, %s242
      %p249 = scmp.eq.s32.totalorder %s33, 1
      %p250 = por %p248, %p249
      %p251 = scmp.ne.s32.totalorder %s242, %s243
      %p252 = scmp.eq.s32.totalorder %s33, 0
      %p253 = por %p251, %p252
      %p254 = scmp.ne.s32.totalorder %s242, %s243
      %p255 = scmp.eq.s32.totalorder %s34, 1
      %p256 = por %p254, %p255
      %p258 = scmp.ne.s32.totalorder %s243, %s257
      %p259 = scmp.eq.s32.totalorder %s34, 0
      %p260 = por %p258, %p259
      %s262 = sadd.s32 %s261, 1
      %p265 = scmp.eq.s32.totalorder %s28, 1
      %p266 = scmp.ne.s32.totalorder %s261, %s263
      %p267 = scmp.eq.s32.totalorder %s28, 0
      %p268 = por %p266, %p267
      %p269 = scmp.ne.s32.totalorder %s261, %s263
      %p270 = scmp.eq.s32.totalorder %s33, 1
      %p271 = por %p269, %p270
      %p272 = scmp.ne.s32.totalorder %s263, %s264
      %p273 = scmp.eq.s32.totalorder %s33, 0
      %p274 = por %p272, %p273
      %p275 = scmp.ne.s32.totalorder %s263, %s264
      %p276 = scmp.eq.s32.totalorder %s34, 1
      %p277 = por %p275, %p276
      %p279 = scmp.ne.s32.totalorder %s264, %s278
      %p280 = scmp.eq.s32.totalorder %s34, 0
      %p281 = por %p279, %p280
      %s283 = sadd.s32 %s282, 1
      %p286 = scmp.eq.s32.totalorder %s28, 1
      %p287 = scmp.ne.s32.totalorder %s282, %s284
      %p288 = scmp.eq.s32.totalorder %s28, 0
      %p289 = por %p287, %p288
      %p290 = scmp.ne.s32.totalorder %s282, %s284
      %p291 = scmp.eq.s32.totalorder %s33, 1
      %p292 = por %p290, %p291
      %p293 = scmp.ne.s32.totalorder %s284, %s285
      %p294 = scmp.eq.s32.totalorder %s33, 0
      %p295 = por %p293, %p294
      %p296 = scmp.ne.s32.totalorder %s284, %s285
      %p297 = scmp.eq.s32.totalorder %s34, 1
      %p298 = por %p296, %p297
      %p300 = scmp.ne.s32.totalorder %s285, %s299
      %p301 = scmp.eq.s32.totalorder %s34, 0
      %p302 = por %p300, %p301
      %s304 = sadd.s32 %s303, 1
      %p307 = scmp.eq.s32.totalorder %s28, 1
      %p308 = scmp.ne.s32.totalorder %s303, %s305
      %p309 = scmp.eq.s32.totalorder %s28, 0
      %p310 = por %p308, %p309
      %p311 = scmp.ne.s32.totalorder %s303, %s305
      %p312 = scmp.eq.s32.totalorder %s33, 1
      %p313 = por %p311, %p312
      %p314 = scmp.ne.s32.totalorder %s305, %s306
      %p315 = scmp.eq.s32.totalorder %s33, 0
      %p316 = por %p314, %p315
      %p317 = scmp.ne.s32.totalorder %s305, %s306
      %p318 = scmp.eq.s32.totalorder %s34, 1
      %p319 = por %p317, %p318
      %p321 = scmp.ne.s32.totalorder %s306, %s320
      %p322 = scmp.eq.s32.totalorder %s34, 0
      %p323 = por %p321, %p322
      %s325 = sadd.s32 %s324, 1
      %p328 = scmp.eq.s32.totalorder %s28, 1
      %p329 = scmp.ne.s32.totalorder %s324, %s326
      %p330 = scmp.eq.s32.totalorder %s28, 0
      %p331 = por %p329, %p330
      %p332 = scmp.ne.s32.totalorder %s324, %s326
      %p333 = scmp.eq.s32.totalorder %s33, 1
      %p334 = por %p332, %p333
      %p335 = scmp.ne.s32.totalorder %s326, %s327
      %p336 = scmp.eq.s32.totalorder %s33, 0
      %p337 = por %p335, %p336
      %p338 = scmp.ne.s32.totalorder %s326, %s327
      %p339 = scmp.eq.s32.totalorder %s34, 1
      %p340 = por %p338, %p339
      %p342 = scmp.ne.s32.totalorder %s327, %s341
      %p343 = scmp.eq.s32.totalorder %s34, 0
      %p344 = por %p342, %p343
      %s346 = sadd.s32 %s345, 1
      %p349 = scmp.eq.s32.totalorder %s28, 1
      %p350 = scmp.ne.s32.totalorder %s345, %s347
      %p351 = scmp.eq.s32.totalorder %s28, 0
      %p352 = por %p350, %p351
      %p353 = scmp.ne.s32.totalorder %s345, %s347
      %p354 = scmp.eq.s32.totalorder %s33, 1
      %p355 = por %p353, %p354
      %p356 = scmp.ne.s32.totalorder %s347, %s348
      %p357 = scmp.eq.s32.totalorder %s33, 0
      %p358 = por %p356, %p357
      %p359 = scmp.ne.s32.totalorder %s347, %s348
      %p360 = scmp.eq.s32.totalorder %s34, 1
      %p361 = por %p359, %p360
      %p363 = scmp.ne.s32.totalorder %s348, %s362
      %p364 = scmp.eq.s32.totalorder %s34, 0
      %p365 = por %p363, %p364
      %s367 = sadd.s32 %s366, 1
      %p370 = scmp.eq.s32.totalorder %s28, 1
      %p371 = scmp.ne.s32.totalorder %s366, %s368
      %p372 = scmp.eq.s32.totalorder %s28, 0
      %p373 = por %p371, %p372
      %p374 = scmp.ne.s32.totalorder %s366, %s368
      %p375 = scmp.eq.s32.totalorder %s33, 1
      %p376 = por %p374, %p375
      %p377 = scmp.ne.s32.totalorder %s368, %s369
      %p378 = scmp.eq.s32.totalorder %s33, 0
      %p379 = por %p377, %p378
      %p380 = scmp.ne.s32.totalorder %s368, %s369
      %p381 = scmp.eq.s32.totalorder %s34, 1
      %p382 = por %p380, %p381
      %p384 = scmp.ne.s32.totalorder %s369, %s383
      %p385 = scmp.eq.s32.totalorder %s34, 0
      %p386 = por %p384, %p385
      %s388 = sadd.s32 %s387, 1
      %p391 = scmp.eq.s32.totalorder %s28, 1
      %p392 = scmp.ne.s32.totalorder %s387, %s389
      %p393 = scmp.eq.s32.totalorder %s28, 0
      %p394 = por %p392, %p393
      %p395 = scmp.ne.s32.totalorder %s387, %s389
      %p396 = scmp.eq.s32.totalorder %s33, 1
      %p397 = por %p395, %p396
      %p398 = scmp.ne.s32.totalorder %s389, %s390
      %p399 = scmp.eq.s32.totalorder %s33, 0
      %p400 = por %p398, %p399
      %p401 = scmp.ne.s32.totalorder %s389, %s390
      %p402 = scmp.eq.s32.totalorder %s34, 1
      %p403 = por %p401, %p402
      %p405 = scmp.ne.s32.totalorder %s390, %s404
      %p406 = scmp.eq.s32.totalorder %s34, 0
      %p407 = por %p405, %p406
      %s408 = ssub.s32 %s28, %s35
      %p409 = scmp.eq.s32.totalorder %s408, 0
      %s411 = sadd.s32 %s410, 1
      %s412 = scalar_select %p409, %s410, %s411
      %p415 = pneg %p409
      %p416 = scmp.eq.s32.totalorder %s28, 1
      %p417 = por %p415, %p416
      %p418 = scmp.ne.s32.totalorder %s410, %s413
      %p419 = scmp.eq.s32.totalorder %s28, 0
      %p420 = por %p418, %p419
      %p421 = scmp.ne.s32.totalorder %s410, %s413
      %p422 = scmp.eq.s32.totalorder %s33, 1
      %p423 = por %p421, %p422
      %p424 = scmp.ne.s32.totalorder %s413, %s414
      %p425 = scmp.eq.s32.totalorder %s33, 0
      %p426 = por %p424, %p425
      %p427 = scmp.ne.s32.totalorder %s413, %s414
      %p428 = scmp.eq.s32.totalorder %s34, 1
      %p429 = por %p427, %p428
      %p431 = scmp.ne.s32.totalorder %s414, %s430
      %p432 = scmp.eq.s32.totalorder %s34, 0
      %p433 = por %p431, %p432
      %p434 = scmp.le.s32.totalorder 1, %s28
      %p435 = scmp.lt.s32.totalorder %s28, 3
      %p436 = pnand %p434, %p435
      %p437 = pneg %p436
      // Predicated region
      $region9: #{main_model_forward.1} parent=5 // pred_check
        _
      $region10: #{main_model_forward.1} parent=5 // pred_check_branch
        %439 = sbr.rel (%p436) target = $region12
      $region11: #{main_model_forward.1} parent=5 // pred_region
        %s440 = ssub.s32 %s28, 1
        // Predicated region
        $region13: #{main_model_forward.1} parent=11 // pred_check
          %p441 = pneg %p127
        $region14: #{main_model_forward.1} parent=11 // pred_check_branch
          %443 = sbr.rel (%p441) target = $region16
        $region15: #{main_model_forward.1} parent=11 // pred_region
          _
        $region16: #{main_model_forward.1} parent=11 // pred_fallthru
          _
        // Predicated region
        $region17: #{main_model_forward.1} parent=11 // pred_check
          %p444 = pneg %p148
        $region18: #{main_model_forward.1} parent=11 // pred_check_branch
          %446 = sbr.rel (%p444) target = $region20
        $region19: #{main_model_forward.1} parent=11 // pred_region
          _
        $region20: #{main_model_forward.1} parent=11 // pred_fallthru
          _
        // Predicated region
        $region21: #{main_model_forward.1} parent=11 // pred_check
          %p447 = pneg %p169
        $region22: #{main_model_forward.1} parent=11 // pred_check_branch
          %449 = sbr.rel (%p447) target = $region24
        $region23: #{main_model_forward.1} parent=11 // pred_region
          _
        $region24: #{main_model_forward.1} parent=11 // pred_fallthru
          _
        // Predicated region
        $region25: #{main_model_forward.1} parent=11 // pred_check
          %p450 = pneg %p190
        $region26: #{main_model_forward.1} parent=11 // pred_check_branch
          %452 = sbr.rel (%p450) target = $region28
        $region27: #{main_model_forward.1} parent=11 // pred_region
          _
        $region28: #{main_model_forward.1} parent=11 // pred_fallthru
          _
        // Predicated region
        $region29: #{main_model_forward.1} parent=11 // pred_check
          %p453 = pneg %p211
        $region30: #{main_model_forward.1} parent=11 // pred_check_branch
          %455 = sbr.rel (%p453) target = $region32
        $region31: #{main_model_forward.1} parent=11 // pred_region
          _
        $region32: #{main_model_forward.1} parent=11 // pred_fallthru
          _
        // Predicated region
        $region33: #{main_model_forward.1} parent=11 // pred_check
          %p456 = pneg %p232
        $region34: #{main_model_forward.1} parent=11 // pred_check_branch
          %458 = sbr.rel (%p456) target = $region36
        $region35: #{main_model_forward.1} parent=11 // pred_region
          _
        $region36: #{main_model_forward.1} parent=11 // pred_fallthru
          _
        // Predicated region
        $region37: #{main_model_forward.1} parent=11 // pred_check
          %p459 = pneg %p253
        $region38: #{main_model_forward.1} parent=11 // pred_check_branch
          %461 = sbr.rel (%p459) target = $region40
        $region39: #{main_model_forward.1} parent=11 // pred_region
          _
        $region40: #{main_model_forward.1} parent=11 // pred_fallthru
          _
        // Predicated region
        $region41: #{main_model_forward.1} parent=11 // pred_check
          %p462 = pneg %p274
        $region42: #{main_model_forward.1} parent=11 // pred_check_branch
          %464 = sbr.rel (%p462) target = $region44
        $region43: #{main_model_forward.1} parent=11 // pred_region
          _
        $region44: #{main_model_forward.1} parent=11 // pred_fallthru
          _
        // Predicated region
        $region45: #{main_model_forward.1} parent=11 // pred_check
          %p465 = pneg %p295
        $region46: #{main_model_forward.1} parent=11 // pred_check_branch
          %467 = sbr.rel (%p465) target = $region48
        $region47: #{main_model_forward.1} parent=11 // pred_region
          _
        $region48: #{main_model_forward.1} parent=11 // pred_fallthru
          _
        // Predicated region
        $region49: #{main_model_forward.1} parent=11 // pred_check
          %p468 = pneg %p316
        $region50: #{main_model_forward.1} parent=11 // pred_check_branch
          %470 = sbr.rel (%p468) target = $region52
        $region51: #{main_model_forward.1} parent=11 // pred_region
          _
        $region52: #{main_model_forward.1} parent=11 // pred_fallthru
          _
        // Predicated region
        $region53: #{main_model_forward.1} parent=11 // pred_check
          %p471 = pneg %p337
        $region54: #{main_model_forward.1} parent=11 // pred_check_branch
          %473 = sbr.rel (%p471) target = $region56
        $region55: #{main_model_forward.1} parent=11 // pred_region
          _
        $region56: #{main_model_forward.1} parent=11 // pred_fallthru
          _
        // Predicated region
        $region57: #{main_model_forward.1} parent=11 // pred_check
          %p474 = pneg %p358
        $region58: #{main_model_forward.1} parent=11 // pred_check_branch
          %476 = sbr.rel (%p474) target = $region60
        $region59: #{main_model_forward.1} parent=11 // pred_region
          _
        $region60: #{main_model_forward.1} parent=11 // pred_fallthru
          _
        // Predicated region
        $region61: #{main_model_forward.1} parent=11 // pred_check
          %p477 = pneg %p379
        $region62: #{main_model_forward.1} parent=11 // pred_check_branch
          %479 = sbr.rel (%p477) target = $region64
        $region63: #{main_model_forward.1} parent=11 // pred_region
          _
        $region64: #{main_model_forward.1} parent=11 // pred_fallthru
          _
        // Predicated region
        $region65: #{main_model_forward.1} parent=11 // pred_check
          %p480 = pneg %p400
        $region66: #{main_model_forward.1} parent=11 // pred_check_branch
          %482 = sbr.rel (%p480) target = $region68
        $region67: #{main_model_forward.1} parent=11 // pred_region
          _
        $region68: #{main_model_forward.1} parent=11 // pred_fallthru
          _
      $region12: #{main_model_forward.1} parent=5 // pred_fallthru
        _
      %p483 = scmp.lt.s32.totalorder %s28, 2
      // Predicated region
      $region69: #{main_model_forward.1} parent=5 // pred_check
        %p484 = pneg %p483
      $region70: #{main_model_forward.1} parent=5 // pred_check_branch
        %486 = sbr.rel (%p484) target = $region72
      $region71: #{main_model_forward.1} parent=5 // pred_region
        // Predicated region
        $region73: #{main_model_forward.1} parent=71 // pred_check
          %p487 = pneg %p48
        $region74: #{main_model_forward.1} parent=71 // pred_check_branch
          %489 = sbr.rel (%p487) target = $region76
        $region75: #{main_model_forward.1} parent=71 // pred_region
          %s490 = sand.u32 %s38, 1
          %s491 = sand.u32 %s38, 1
          %s492 = smul.addr %s491, 64
          %s493 = scalar_lea.vmem [#allocation5], %s492
          %s494 = smul.addr %s28, 8
          %s495 = scalar_lea.vmem %s0, %s494
          // Predicated region
          $region77: #{main_model_forward.1} parent=75 // pred_check
            _
          $region78: #{main_model_forward.1} parent=75 // pred_check_branch
            %497 = sbr.rel (0) target = $region80
          $region79: #{main_model_forward.1} parent=75 // pred_region
            // Predicated region
            $region81: #{main_model_forward.1} parent=79 // pred_check
              _
            $region82: #{main_model_forward.1} parent=79 // pred_check_branch
              %499 = sbr.rel (0) target = $region84
            $region83: #{main_model_forward.1} parent=79 // pred_region
              // Predicated region
              $region96: #{main_model_forward.1} parent=83 // pred_check
                _
              $region97: #{main_model_forward.1} parent=83 // pred_check_branch
                %529 = sbr.rel (0) target = $region99
              $region98: #{main_model_forward.1} parent=83 // pred_region
                loop: start=0, step=1, limit=1
                $region100: #{main_model_forward.1} parent=98 // loop_pre_header
                  _
                $region101: #{main_model_forward.1} parent=98 // loop_header
                  %s531 = sphi 0, %s535
                  %p532 = scmp.ge.s32.totalorder %s531, 1
                  %s536 = sphi %s495, %s495
                  %s537 = sphi %s493, %s493
                $region102: #{main_model_forward.1} parent=98 // loop_header_branch
                  %534 = sbr.rel (%p532) target = $region106
                $region103: #{main_model_forward.1} parent=98 // loop_body
                  %v538 = vld [vmem:[%s536] sm:$0xff]
                  %539 = vst [vmem:[%s537] sm:$0xff] %v538
                  %v540 = vld [vmem:[%s536 + $0x10] sm:$0xff]
                  %541 = vst [vmem:[%s537 + $0x8] sm:$0xff] %v540
                  %v542 = vld [vmem:[%s536 + $0x20] sm:$0xff]
                  %543 = vst [vmem:[%s537 + $0x10] sm:$0xff] %v542
                  %v544 = vld [vmem:[%s536 + $0x30] sm:$0xff]
                  %545 = vst [vmem:[%s537 + $0x18] sm:$0xff] %v544
                  %v546 = vld [vmem:[%s536 + $0x40] sm:$0xff]
                  %547 = vst [vmem:[%s537 + $0x20] sm:$0xff] %v546
                  %v548 = vld [vmem:[%s536 + $0x50] sm:$0xff]
                  %549 = vst [vmem:[%s537 + $0x28] sm:$0xff] %v548
                  %v550 = vld [vmem:[%s536 + $0x60] sm:$0xff]
                  %551 = vst [vmem:[%s537 + $0x30] sm:$0xff] %v550
                  %v552 = vld [vmem:[%s536 + $0x70] sm:$0xff]
                  %553 = vst [vmem:[%s537 + $0x38] sm:$0xff] %v552
                $region104: #{main_model_forward.1} parent=98 // loop_footer
                  %s535 = sadd.s32 1, %s531
                $region105: #{main_model_forward.1} parent=98 // loop_footer_branch
                  %530 = sbr.rel target = $region101
                $region106: #{main_model_forward.1} parent=98 // loop_exit
                  _
              $region99: #{main_model_forward.1} parent=83 // pred_fallthru
                _
              // Predicated region
              $region107: #{main_model_forward.1} parent=83 // pred_check
                _
              $region108: #{main_model_forward.1} parent=83 // pred_check_branch
                %555 = sbr.rel target = $region110
              $region109: #{main_model_forward.1} parent=83 // pred_region
                _
              $region110: #{main_model_forward.1} parent=83 // pred_fallthru
                _
            $region84: #{main_model_forward.1} parent=79 // pred_fallthru
              _
            // Predicated region
            $region85: #{main_model_forward.1} parent=79 // pred_check
              _
            $region86: #{main_model_forward.1} parent=79 // pred_check_branch
              %501 = sbr.rel target = $region88
            $region87: #{main_model_forward.1} parent=79 // pred_region
              %s503 = ssub.s32 256, 1
              loop: start=0, step=1, limit=1
              $region89: #{main_model_forward.1} parent=87 // loop_pre_header
                _
              $region90: #{main_model_forward.1} parent=87 // loop_header
                %s505 = sphi 0, %s509
                %p506 = scmp.ge.s32.totalorder %s505, 1
                %s510 = sphi %s495, %s495
                %s511 = sphi %s493, %s493
              $region91: #{main_model_forward.1} parent=87 // loop_header_branch
                %508 = sbr.rel (%p506) target = $region95
              $region92: #{main_model_forward.1} parent=87 // loop_body
                %v512 = vld [vmem:[%s510] sm:%s503]
                %513 = vst [vmem:[%s511] sm:%s503] %v512
                %v514 = vld [vmem:[%s510 + $0x10] sm:%s503]
                %515 = vst [vmem:[%s511 + $0x8] sm:%s503] %v514
                %v516 = vld [vmem:[%s510 + $0x20] sm:%s503]
                %517 = vst [vmem:[%s511 + $0x10] sm:%s503] %v516
                %v518 = vld [vmem:[%s510 + $0x30] sm:%s503]
                %519 = vst [vmem:[%s511 + $0x18] sm:%s503] %v518
                %v520 = vld [vmem:[%s510 + $0x40] sm:%s503]
                %521 = vst [vmem:[%s511 + $0x20] sm:%s503] %v520
                %v522 = vld [vmem:[%s510 + $0x50] sm:%s503]
                %523 = vst [vmem:[%s511 + $0x28] sm:%s503] %v522
                %v524 = vld [vmem:[%s510 + $0x60] sm:%s503]
                %525 = vst [vmem:[%s511 + $0x30] sm:%s503] %v524
                %v526 = vld [vmem:[%s510 + $0x70] sm:%s503]
                %527 = vst [vmem:[%s511 + $0x38] sm:%s503] %v526
              $region93: #{main_model_forward.1} parent=87 // loop_footer
                %s509 = sadd.s32 1, %s505
              $region94: #{main_model_forward.1} parent=87 // loop_footer_branch
                %504 = sbr.rel target = $region90
              $region95: #{main_model_forward.1} parent=87 // loop_exit
                _
            $region88: #{main_model_forward.1} parent=79 // pred_fallthru
              _
          $region80: #{main_model_forward.1} parent=75 // pred_fallthru
            _
          %556 = vnop
        $region76: #{main_model_forward.1} parent=71 // pred_fallthru
          _
        // Predicated region
        $region111: #{main_model_forward.1} parent=71 // pred_check
          %p557 = pneg %p74
        $region112: #{main_model_forward.1} parent=71 // pred_check_branch
          %559 = sbr.rel (%p557) target = $region114
        $region113: #{main_model_forward.1} parent=71 // pred_region
          %p560 = scmp.lt.s32.totalorder %s28, 1
          %s561 = scalar_select %p560, %s28, 1
          %s562 = smul.addr %s561, 8
          %s563 = scalar_lea.vmem %s1, %s562
        $region114: #{main_model_forward.1} parent=71 // pred_fallthru
          _
        // Predicated region
        $region115: #{main_model_forward.1} parent=71 // pred_check
          %p564 = pneg %p100
        $region116: #{main_model_forward.1} parent=71 // pred_check_branch
          %566 = sbr.rel (%p564) target = $region118
        $region117: #{main_model_forward.1} parent=71 // pred_region
          %p567 = scmp.lt.s32.totalorder %s28, 1
          %s568 = scalar_select %p567, %s28, 1
          %s569 = smul.addr %s568, 8
          %s570 = scalar_lea.vmem %s2, %s569
        $region118: #{main_model_forward.1} parent=71 // pred_fallthru
          _
      $region72: #{main_model_forward.1} parent=5 // pred_fallthru
        _
      %p571 = scmp.le.s32.totalorder 1, %s28
      %p572 = scmp.lt.s32.totalorder %s28, 3
      %p573 = pnand %p571, %p572
      %p574 = pneg %p573
      // Predicated region
      $region119: #{main_model_forward.1} parent=5 // pred_check
        _
      $region120: #{main_model_forward.1} parent=5 // pred_check_branch
        %576 = sbr.rel (%p573) target = $region122
      $region121: #{main_model_forward.1} parent=5 // pred_region
        %s577 = ssub.s32 %s28, 1
        %s578 = sand.u32 %s41, 1
        %s579 = sand.u32 %s41, 1
        %s580 = smul.addr %s579, 64
        %s581 = scalar_lea.vmem [#allocation5], %s580
        // Predicated region
        $region123: #{main_model_forward.1} parent=121 // pred_check
          %p582 = pneg %p54
        $region124: #{main_model_forward.1} parent=121 // pred_check_branch
          %584 = sbr.rel (%p582) target = $region126
        $region125: #{main_model_forward.1} parent=121 // pred_region
          _
        $region126: #{main_model_forward.1} parent=121 // pred_fallthru
          _
        %s585 = sand.u32 %s41, 1
        %s586 = sand.u32 %s41, 1
        %s587 = smul.addr %s586, 64
        %s588 = scalar_lea.vmem [#allocation5], %s587
        %p589 = pneg %p54
        %p590 = pneg %p51
        %p591 = scmp.lt.s32.totalorder %s33, 1
        %s592 = scalar_select %p591, %s33, 1
        %s593 = smul.addr %s592, 8
        %s594 = scalar_lea.vmem %s1, %s593
        %p595 = pneg %p80
        %p596 = pneg %p77
        %p597 = scmp.lt.s32.totalorder %s33, 1
        %s598 = scalar_select %p597, %s33, 1
        %s599 = smul.addr %s598, 8
        %s600 = scalar_lea.vmem %s2, %s599
        %p601 = pneg %p106
        %p602 = pneg %p103
        %p603 = pneg %p127
        %p604 = pneg %p124
        %p605 = pneg %p148
        %p606 = pneg %p145
        %p607 = pneg %p169
        %p608 = pneg %p166
        %p609 = pneg %p190
        %p610 = pneg %p187
        %p611 = pneg %p211
        %p612 = pneg %p208
        %p613 = pneg %p232
        %p614 = pneg %p229
        %p615 = pneg %p253
        %p616 = pneg %p250
        %p617 = pneg %p274
        %p618 = pneg %p271
        %p619 = pneg %p295
        %p620 = pneg %p292
        %p621 = pneg %p316
        %p622 = pneg %p313
        %p623 = pneg %p337
        %p624 = pneg %p334
        %p625 = pneg %p358
        %p626 = pneg %p355
        %p627 = pneg %p379
        %p628 = pneg %p376
        %p629 = pneg %p400
        %p630 = pneg %p397
        %p631 = pneg %p426
        %p632 = pneg %p423
        %s633 = sand.u32 %s413, 1
        %s634 = scalar_lea.sflag [#allocation7], %s633
        %s635 = sand.u32 %s413, 1
        %s636 = smul.addr %s635, 8
        %s637 = scalar_lea.vmem [#allocation6], %s636
        %p638 = scmp.lt.s32.totalorder %s33, 1
        %s639 = scalar_select %p638, %s33, 1
        %s640 = smul.addr %s639, 8
        %s641 = scalar_lea.vmem %s1, %s640
        %p642 = scmp.lt.s32.totalorder %s33, 1
        %s643 = scalar_select %p642, %s33, 1
        %s644 = smul.addr %s643, 8
        %s645 = scalar_lea.vmem %s2, %s644
        %v646 = vld [vmem:[%s581] sm:$0xff]
        %v647 = vld [vmem:[%s581 + $0x8] sm:$0xff]
        %v648 = vld [vmem:[%s581 + $0x10] sm:$0xff]
        %v649 = vld [vmem:[%s581 + $0x18] sm:$0xff]
        %v650 = vld [vmem:[%s581 + $0x20] sm:$0xff]
        %v651 = vld [vmem:[%s581 + $0x28] sm:$0xff]
        %v652 = vld [vmem:[%s581 + $0x30] sm:$0xff]
        %v653 = vld [vmem:[%s581 + $0x38] sm:$0xff]
        %v654 = vld [vmem:[%s3] sm:$0xff]
        %v655 = vld [vmem:[%s3 + $0x8] sm:$0xff]
        %v656 = vld [vmem:[%s3 + $0x10] sm:$0xff]
        %v657 = vld [vmem:[%s3 + $0x18] sm:$0xff]
        %v658 = vld [vmem:[%s5] sm:$0x1]
        %v660 = vperm.slane %v658, 0
        %vm662 = vcmask 261120
        %v664 = vsel %vm662, %v646, 0
        %v667 = vsel %vm662, %v647, 0
        %v670 = vsel %vm662, %v648, 0
        %v673 = vsel %vm662, %v649, 0
        %v676 = vsel %vm662, %v650, 0
        %v679 = vsel %vm662, %v651, 0
        %v682 = vsel %vm662, %v652, 0
        %v685 = vsel %vm662, %v653, 0
        %687 = vmatpush.msra.mxu0 0.0
        %688 = vmatpush.msra.mxu0 0.0
        %689 = vmatpush.msra.mxu0 0.0
        %690 = vmatpush.msra.mxu0 0.0
        %691 = vmatpush.msra.mxu0 0.0
        %692 = vmatpush.msra.mxu0 0.0
        %693 = vmatpush.msra.mxu0 0.0
        %694 = vmatpush.msra.mxu0 0.0
        %695 = vmatpush.msra.mxu0 0.0
        %696 = vmatpush.msra.mxu0 0.0
        %697 = vmatpush.msra.mxu0 0.0
        %698 = vmatpush.msra.mxu0 0.0
        %699 = vmatpush.msra.mxu0 %v657
        %700 = vmatpush.msra.mxu0 %v656
        %701 = vmatpush.msra.mxu0 %v655
        %702 = vmatpush.msra.mxu0 %v654
        %703 = vmatmul.f32.gmra.mxu0 %v664
        %v704 = vpop.f32.mrf.mxu0
        %v705 = vadd.f32 %v660, %v704
        %706 = vmatmul.f32.gmra.mxu0 %v667
        %v707 = vpop.f32.mrf.mxu0
        %v708 = vadd.f32 %v660, %v707
        %709 = vmatmul.f32.gmra.mxu0 %v670
        %v710 = vpop.f32.mrf.mxu0
        %v711 = vadd.f32 %v660, %v710
        %712 = vmatmul.f32.gmra.mxu0 %v673
        %v713 = vpop.f32.mrf.mxu0
        %v714 = vadd.f32 %v660, %v713
        %715 = vmatmul.f32.gmra.mxu0 %v676
        %v716 = vpop.f32.mrf.mxu0
        %v717 = vadd.f32 %v660, %v716
        %718 = vmatmul.f32.gmra.mxu0 %v679
        %v719 = vpop.f32.mrf.mxu0
        %v720 = vadd.f32 %v660, %v719
        %721 = vmatmul.f32.gmra.mxu0 %v682
        %v722 = vpop.f32.mrf.mxu0
        %v723 = vadd.f32 %v660, %v722
        %724 = vmatmul.f32.gmra.mxu0 %v685
        %v725 = vpop.f32.mrf.mxu0
        %v726 = vadd.f32 %v660, %v725
        %727 = vdwg.mxu0
        %728 = vst [vmem:[#allocation2] sm:$0xff] %v705
        %729 = vst [vmem:[#allocation2 + $0x8] sm:$0xff] %v708
        %730 = vst [vmem:[#allocation2 + $0x10] sm:$0xff] %v711
        %731 = vst [vmem:[#allocation2 + $0x18] sm:$0xff] %v714
        %732 = vst [vmem:[#allocation2 + $0x20] sm:$0xff] %v717
        %733 = vst [vmem:[#allocation2 + $0x28] sm:$0xff] %v720
        %734 = vst [vmem:[#allocation2 + $0x30] sm:$0xff] %v723
        %735 = vst [vmem:[#allocation2 + $0x38] sm:$0xff] %v726
        %v736 = vld [vmem:[%s4] sm:$0xff]
        %v737 = vld [vmem:[%s4 + $0x8] sm:$0xff]
        %v738 = vld [vmem:[%s4 + $0x10] sm:$0xff]
        %v739 = vld [vmem:[%s4 + $0x18] sm:$0xff]
        %v740 = vld [vmem:[%s641] sm:$0xff]
        %v741 = vld [vmem:[%s645] sm:$0xff]
        %v742 = vld [vmem:[#allocation2] sm:$0xff]
        %v744 = vsel %vm662, %v740, 0
        %746 = vmatpush.msra.mxu0 0.0
        %747 = vmatpush.msra.mxu0 0.0
        %748 = vmatpush.msra.mxu0 0.0
        %749 = vmatpush.msra.mxu0 0.0
        %750 = vmatpush.msra.mxu0 0.0
        %751 = vmatpush.msra.mxu0 0.0
        %752 = vmatpush.msra.mxu0 0.0
        %753 = vmatpush.msra.mxu0 0.0
        %754 = vmatpush.msra.mxu0 0.0
        %755 = vmatpush.msra.mxu0 0.0
        %756 = vmatpush.msra.mxu0 0.0
        %757 = vmatpush.msra.mxu0 0.0
        %758 = vmatpush.msra.mxu0 %v739
        %759 = vmatpush.msra.mxu0 %v738
        %760 = vmatpush.msra.mxu0 %v737
        %761 = vmatpush.msra.mxu0 %v736
        %762 = vmatmul.f32.gmra.mxu0 %v744
        %v763 = vpop.f32.mrf.mxu0
        %v764 = vadd.f32 %v742, %v763
        %765 = vdwg.mxu0
        %v766 = vxor.u32 %v764, 2147483648
        %v767 = vmul.f32 %v766, 1.442695
        %v768 = vpow.pop %v767
        %v769 = vadd.f32 %v768, 1.0
        %v770 = vrcp.pop %v769
        %v771 = vmul.f32 %v769, %v770
        %v772 = vsub.f32 1.0, %v771
        %v773 = vmul.f32 %v770, %v772
        %v774 = vadd.f32 %v770, %v773
        %vm775 = vweird.f32 %v769
        %vm776 = vweird.f32 %v770
        %vm777 = vmor %vm775, %vm776
        %v778 = vsel %vm777, %v770, %v774
        %v779 = vand.u32 2147483647, %v769
        %vm780 = vcmp.eq.f32.partialorder %v779, 8.507059e+37
        %v781 = vand.u32 %v769, 2147483648
        %v782 = vor.u32 1.1754944e-38, %v781
        %v783 = vsel %vm780, %v782, %v778
        %v784 = vmul.f32 1.0, %v783
        %v785 = vtanh.pop %v764
        %787 = vrot.lane.b32.xlu0 %v741, 32
        %v788 = vpop.permute.xlu0 %787
        %v790 = vmul.f32 %v784, %v788
        %792 = vrot.lane.b32.xlu0 %v785, 32
        %v793 = vpop.permute.xlu0 %792
        %v795 = vmul.f32 %v784, %v793
        %797 = vrot.lane.b32.xlu0 %v795, 32
        %v798 = vpop.permute.xlu0 %797
        %v800 = vadd.f32 %v790, %v798
        %v801 = vtanh.pop %v800
        %803 = vrot.lane.b32.xlu0 %v801, 32
        %v804 = vpop.permute.xlu0 %803
        %v806 = vmul.f32 %v784, %v804
        %s807 = scalar_lea.vmem [#allocation2], 8
        %v808 = vld [vmem:[%s807] sm:$0xff]
        %810 = vrot.lane.b32.xlu0 %v806, 64
        %v811 = vpop.permute.xlu0 %810
        %v812 = vsel %vm662, %v811, 0
        %814 = vmatpush.msra.mxu0 0.0
        %815 = vmatpush.msra.mxu0 0.0
        %816 = vmatpush.msra.mxu0 0.0
        %817 = vmatpush.msra.mxu0 0.0
        %818 = vmatpush.msra.mxu0 0.0
        %819 = vmatpush.msra.mxu0 0.0
        %820 = vmatpush.msra.mxu0 0.0
        %821 = vmatpush.msra.mxu0 0.0
        %822 = vmatpush.msra.mxu0 0.0
        %823 = vmatpush.msra.mxu0 0.0
        %824 = vmatpush.msra.mxu0 0.0
        %825 = vmatpush.msra.mxu0 0.0
        %826 = vmatpush.msra.mxu0 %v739
        %827 = vmatpush.msra.mxu0 %v738
        %828 = vmatpush.msra.mxu0 %v737
        %829 = vmatpush.msra.mxu0 %v736
        %830 = vmatmul.f32.gmra.mxu0 %v812
        %v831 = vpop.f32.mrf.mxu0
        %v832 = vadd.f32 %v808, %v831
        %833 = vdwg.mxu0
        %v834 = vxor.u32 %v832, 2147483648
        %v835 = vmul.f32 %v834, 1.442695
        %v836 = vpow.pop %v835
        %v837 = vadd.f32 %v836, 1.0
        %v838 = vrcp.pop %v837
        %v839 = vmul.f32 %v837, %v838
        %v840 = vsub.f32 1.0, %v839
        %v841 = vmul.f32 %v838, %v840
        %v842 = vadd.f32 %v838, %v841
        %vm843 = vweird.f32 %v837
        %vm844 = vweird.f32 %v838
        %vm845 = vmor %vm843, %vm844
        %v846 = vsel %vm845, %v838, %v842
        %v847 = vand.u32 2147483647, %v837
        %vm848 = vcmp.eq.f32.partialorder %v847, 8.507059e+37
        %v849 = vand.u32 %v837, 2147483648
        %v850 = vor.u32 1.1754944e-38, %v849
        %v851 = vsel %vm848, %v850, %v846
        %v852 = vmul.f32 1.0, %v851
        %v853 = vtanh.pop %v832
        %v854 = vmul.f32 %v852, %v800
        %856 = vrot.lane.b32.xlu0 %v853, 32
        %v857 = vpop.permute.xlu0 %856
        %v859 = vmul.f32 %v852, %v857
        %861 = vrot.lane.b32.xlu0 %v859, 32
        %v862 = vpop.permute.xlu0 %861
        %v864 = vadd.f32 %v854, %v862
        %v865 = vtanh.pop %v864
        %867 = vrot.lane.b32.xlu0 %v865, 32
        %v868 = vpop.permute.xlu0 %867
        %v870 = vmul.f32 %v852, %v868
        %s871 = scalar_lea.vmem [#allocation2], 16
        %v872 = vld [vmem:[%s871] sm:$0xff]
        %874 = vrot.lane.b32.xlu0 %v870, 64
        %v875 = vpop.permute.xlu0 %874
        %v876 = vsel %vm662, %v875, 0
        %878 = vmatpush.msra.mxu0 0.0
        %879 = vmatpush.msra.mxu0 0.0
        %880 = vmatpush.msra.mxu0 0.0
        %881 = vmatpush.msra.mxu0 0.0
        %882 = vmatpush.msra.mxu0 0.0
        %883 = vmatpush.msra.mxu0 0.0
        %884 = vmatpush.msra.mxu0 0.0
        %885 = vmatpush.msra.mxu0 0.0
        %886 = vmatpush.msra.mxu0 0.0
        %887 = vmatpush.msra.mxu0 0.0
        %888 = vmatpush.msra.mxu0 0.0
        %889 = vmatpush.msra.mxu0 0.0
        %890 = vmatpush.msra.mxu0 %v739
        %891 = vmatpush.msra.mxu0 %v738
        %892 = vmatpush.msra.mxu0 %v737
        %893 = vmatpush.msra.mxu0 %v736
        %894 = vmatmul.f32.gmra.mxu0 %v876
        %v895 = vpop.f32.mrf.mxu0
        %v896 = vadd.f32 %v872, %v895
        %897 = vdwg.mxu0
        %v898 = vxor.u32 %v896, 2147483648
        %v899 = vmul.f32 %v898, 1.442695
        %v900 = vpow.pop %v899
        %v901 = vadd.f32 %v900, 1.0
        %v902 = vrcp.pop %v901
        %v903 = vmul.f32 %v901, %v902
        %v904 = vsub.f32 1.0, %v903
        %v905 = vmul.f32 %v902, %v904
        %v906 = vadd.f32 %v902, %v905
        %vm907 = vweird.f32 %v901
        %vm908 = vweird.f32 %v902
        %vm909 = vmor %vm907, %vm908
        %v910 = vsel %vm909, %v902, %v906
        %v911 = vand.u32 2147483647, %v901
        %vm912 = vcmp.eq.f32.partialorder %v911, 8.507059e+37
        %v913 = vand.u32 %v901, 2147483648
        %v914 = vor.u32 1.1754944e-38, %v913
        %v915 = vsel %vm912, %v914, %v910
        %v916 = vmul.f32 1.0, %v915
        %v917 = vtanh.pop %v896
        %v918 = vmul.f32 %v916, %v864
        %920 = vrot.lane.b32.xlu0 %v917, 32
        %v921 = vpop.permute.xlu0 %920
        %v923 = vmul.f32 %v916, %v921
        %925 = vrot.lane.b32.xlu0 %v923, 32
        %v926 = vpop.permute.xlu0 %925
        %v928 = vadd.f32 %v918, %v926
        %v929 = vtanh.pop %v928
        %931 = vrot.lane.b32.xlu0 %v929, 32
        %v932 = vpop.permute.xlu0 %931
        %v934 = vmul.f32 %v916, %v932
        %s935 = scalar_lea.vmem [#allocation2], 24
        %v936 = vld [vmem:[%s935] sm:$0xff]
        %938 = vrot.lane.b32.xlu0 %v934, 64
        %v939 = vpop.permute.xlu0 %938
        %v940 = vsel %vm662, %v939, 0
        %942 = vmatpush.msra.mxu0 0.0
        %943 = vmatpush.msra.mxu0 0.0
        %944 = vmatpush.msra.mxu0 0.0
        %945 = vmatpush.msra.mxu0 0.0
        %946 = vmatpush.msra.mxu0 0.0
        %947 = vmatpush.msra.mxu0 0.0
        %948 = vmatpush.msra.mxu0 0.0
        %949 = vmatpush.msra.mxu0 0.0
        %950 = vmatpush.msra.mxu0 0.0
        %951 = vmatpush.msra.mxu0 0.0
        %952 = vmatpush.msra.mxu0 0.0
        %953 = vmatpush.msra.mxu0 0.0
        %954 = vmatpush.msra.mxu0 %v739
        %955 = vmatpush.msra.mxu0 %v738
        %956 = vmatpush.msra.mxu0 %v737
        %957 = vmatpush.msra.mxu0 %v736
        %958 = vmatmul.f32.gmra.mxu0 %v940
        %v959 = vpop.f32.mrf.mxu0
        %v960 = vadd.f32 %v936, %v959
        %961 = vdwg.mxu0
        %v962 = vxor.u32 %v960, 2147483648
        %v963 = vmul.f32 %v962, 1.442695
        %v964 = vpow.pop %v963
        %v965 = vadd.f32 %v964, 1.0
        %v966 = vrcp.pop %v965
        %v967 = vmul.f32 %v965, %v966
        %v968 = vsub.f32 1.0, %v967
        %v969 = vmul.f32 %v966, %v968
        %v970 = vadd.f32 %v966, %v969
        %vm971 = vweird.f32 %v965
        %vm972 = vweird.f32 %v966
        %vm973 = vmor %vm971, %vm972
        %v974 = vsel %vm973, %v966, %v970
        %v975 = vand.u32 2147483647, %v965
        %vm976 = vcmp.eq.f32.partialorder %v975, 8.507059e+37
        %v977 = vand.u32 %v965, 2147483648
        %v978 = vor.u32 1.1754944e-38, %v977
        %v979 = vsel %vm976, %v978, %v974
        %v980 = vmul.f32 1.0, %v979
        %v981 = vtanh.pop %v960
        %v982 = vmul.f32 %v980, %v928
        %984 = vrot.lane.b32.xlu0 %v981, 32
        %v985 = vpop.permute.xlu0 %984
        %v987 = vmul.f32 %v980, %v985
        %989 = vrot.lane.b32.xlu0 %v987, 32
        %v990 = vpop.permute.xlu0 %989
        %v992 = vadd.f32 %v982, %v990
        %v993 = vtanh.pop %v992
        %995 = vrot.lane.b32.xlu0 %v993, 32
        %v996 = vpop.permute.xlu0 %995
        %v998 = vmul.f32 %v980, %v996
        %v999 = vld [vmem:[#allocation2 + $0x20] sm:$0xff]
        %1001 = vrot.lane.b32.xlu0 %v998, 64
        %v1002 = vpop.permute.xlu0 %1001
        %v1003 = vsel %vm662, %v1002, 0
        %1005 = vmatpush.msra.mxu0 0.0
        %1006 = vmatpush.msra.mxu0 0.0
        %1007 = vmatpush.msra.mxu0 0.0
        %1008 = vmatpush.msra.mxu0 0.0
        %1009 = vmatpush.msra.mxu0 0.0
        %1010 = vmatpush.msra.mxu0 0.0
        %1011 = vmatpush.msra.mxu0 0.0
        %1012 = vmatpush.msra.mxu0 0.0
        %1013 = vmatpush.msra.mxu0 0.0
        %1014 = vmatpush.msra.mxu0 0.0
        %1015 = vmatpush.msra.mxu0 0.0
        %1016 = vmatpush.msra.mxu0 0.0
        %1017 = vmatpush.msra.mxu0 %v739
        %1018 = vmatpush.msra.mxu0 %v738
        %1019 = vmatpush.msra.mxu0 %v737
        %1020 = vmatpush.msra.mxu0 %v736
        %1021 = vmatmul.f32.gmra.mxu0 %v1003
        %v1022 = vpop.f32.mrf.mxu0
        %v1023 = vadd.f32 %v999, %v1022
        %1024 = vdwg.mxu0
        %v1025 = vxor.u32 %v1023, 2147483648
        %v1026 = vmul.f32 %v1025, 1.442695
        %v1027 = vpow.pop %v1026
        %v1028 = vadd.f32 %v1027, 1.0
        %v1029 = vrcp.pop %v1028
        %v1030 = vmul.f32 %v1028, %v1029
        %v1031 = vsub.f32 1.0, %v1030
        %v1032 = vmul.f32 %v1029, %v1031
        %v1033 = vadd.f32 %v1029, %v1032
        %vm1034 = vweird.f32 %v1028
        %vm1035 = vweird.f32 %v1029
        %vm1036 = vmor %vm1034, %vm1035
        %v1037 = vsel %vm1036, %v1029, %v1033
        %v1038 = vand.u32 2147483647, %v1028
        %vm1039 = vcmp.eq.f32.partialorder %v1038, 8.507059e+37
        %v1040 = vand.u32 %v1028, 2147483648
        %v1041 = vor.u32 1.1754944e-38, %v1040
        %v1042 = vsel %vm1039, %v1041, %v1037
        %v1043 = vmul.f32 1.0, %v1042
        %v1044 = vtanh.pop %v1023
        %v1045 = vmul.f32 %v1043, %v992
        %1047 = vrot.lane.b32.xlu0 %v1044, 32
        %v1048 = vpop.permute.xlu0 %1047
        %v1050 = vmul.f32 %v1043, %v1048
        %1052 = vrot.lane.b32.xlu0 %v1050, 32
        %v1053 = vpop.permute.xlu0 %1052
        %v1055 = vadd.f32 %v1045, %v1053
        %v1056 = vtanh.pop %v1055
        %1058 = vrot.lane.b32.xlu0 %v1056, 32
        %v1059 = vpop.permute.xlu0 %1058
        %v1061 = vmul.f32 %v1043, %v1059
        %1063 = vrot.lane.b32.xlu0 %v1061, 64
        %v1064 = vpop.permute.xlu0 %1063
        %1066 = vst.msk [vmem:[#allocation3] sm:$0xff] %vm662, %v1064
        %v1067 = vld [vmem:[#allocation2 + $0x28] sm:$0xff]
        %v1068 = vsel %vm662, %v1064, 0
        %1070 = vmatpush.msra.mxu0 0.0
        %1071 = vmatpush.msra.mxu0 0.0
        %1072 = vmatpush.msra.mxu0 0.0
        %1073 = vmatpush.msra.mxu0 0.0
        %1074 = vmatpush.msra.mxu0 0.0
        %1075 = vmatpush.msra.mxu0 0.0
        %1076 = vmatpush.msra.mxu0 0.0
        %1077 = vmatpush.msra.mxu0 0.0
        %1078 = vmatpush.msra.mxu0 0.0
        %1079 = vmatpush.msra.mxu0 0.0
        %1080 = vmatpush.msra.mxu0 0.0
        %1081 = vmatpush.msra.mxu0 0.0
        %1082 = vmatpush.msra.mxu0 %v739
        %1083 = vmatpush.msra.mxu0 %v738
        %1084 = vmatpush.msra.mxu0 %v737
        %1085 = vmatpush.msra.mxu0 %v736
        %1086 = vmatmul.f32.gmra.mxu0 %v1068
        %v1087 = vpop.f32.mrf.mxu0
        %v1088 = vadd.f32 %v1067, %v1087
        %1089 = vdwg.mxu0
        %v1090 = vxor.u32 %v1088, 2147483648
        %v1091 = vmul.f32 %v1090, 1.442695
        %v1092 = vpow.pop %v1091
        %v1093 = vadd.f32 %v1092, 1.0
        %v1094 = vrcp.pop %v1093
        %v1095 = vmul.f32 %v1093, %v1094
        %v1096 = vsub.f32 1.0, %v1095
        %v1097 = vmul.f32 %v1094, %v1096
        %v1098 = vadd.f32 %v1094, %v1097
        %vm1099 = vweird.f32 %v1093
        %vm1100 = vweird.f32 %v1094
        %vm1101 = vmor %vm1099, %vm1100
        %v1102 = vsel %vm1101, %v1094, %v1098
        %v1103 = vand.u32 2147483647, %v1093
        %vm1104 = vcmp.eq.f32.partialorder %v1103, 8.507059e+37
        %v1105 = vand.u32 %v1093, 2147483648
        %v1106 = vor.u32 1.1754944e-38, %v1105
        %v1107 = vsel %vm1104, %v1106, %v1102
        %v1108 = vmul.f32 1.0, %v1107
        %v1109 = vtanh.pop %v1088
        %v1110 = vmul.f32 %v1108, %v1055
        %1112 = vrot.lane.b32.xlu0 %v1109, 32
        %v1113 = vpop.permute.xlu0 %1112
        %v1115 = vmul.f32 %v1108, %v1113
        %1117 = vrot.lane.b32.xlu0 %v1115, 32
        %v1118 = vpop.permute.xlu0 %1117
        %v1120 = vadd.f32 %v1110, %v1118
        %v1121 = vtanh.pop %v1120
        %1123 = vrot.lane.b32.xlu0 %v1121, 32
        %v1124 = vpop.permute.xlu0 %1123
        %v1126 = vmul.f32 %v1108, %v1124
        %1128 = vrot.lane.b32.xlu0 %v1126, 64
        %v1129 = vpop.permute.xlu0 %1128
        %s1131 = scalar_lea.vmem [#allocation3], 8
        %1132 = vst.msk [vmem:[%s1131] sm:$0xff] %vm662, %v1129
        %v1133 = vld [vmem:[#allocation2 + $0x30] sm:$0xff]
        %v1134 = vsel %vm662, %v1129, 0
        %1136 = vmatpush.msra.mxu0 0.0
        %1137 = vmatpush.msra.mxu0 0.0
        %1138 = vmatpush.msra.mxu0 0.0
        %1139 = vmatpush.msra.mxu0 0.0
        %1140 = vmatpush.msra.mxu0 0.0
        %1141 = vmatpush.msra.mxu0 0.0
        %1142 = vmatpush.msra.mxu0 0.0
        %1143 = vmatpush.msra.mxu0 0.0
        %1144 = vmatpush.msra.mxu0 0.0
        %1145 = vmatpush.msra.mxu0 0.0
        %1146 = vmatpush.msra.mxu0 0.0
        %1147 = vmatpush.msra.mxu0 0.0
        %1148 = vmatpush.msra.mxu0 %v739
        %1149 = vmatpush.msra.mxu0 %v738
        %1150 = vmatpush.msra.mxu0 %v737
        %1151 = vmatpush.msra.mxu0 %v736
        %1152 = vmatmul.f32.gmra.mxu0 %v1134
        %v1153 = vpop.f32.mrf.mxu0
        %v1154 = vadd.f32 %v1133, %v1153
        %1155 = vdwg.mxu0
        %v1156 = vxor.u32 %v1154, 2147483648
        %v1157 = vmul.f32 %v1156, 1.442695
        %v1158 = vpow.pop %v1157
        %v1159 = vadd.f32 %v1158, 1.0
        %v1160 = vrcp.pop %v1159
        %v1161 = vmul.f32 %v1159, %v1160
        %v1162 = vsub.f32 1.0, %v1161
        %v1163 = vmul.f32 %v1160, %v1162
        %v1164 = vadd.f32 %v1160, %v1163
        %vm1165 = vweird.f32 %v1159
        %vm1166 = vweird.f32 %v1160
        %vm1167 = vmor %vm1165, %vm1166
        %v1168 = vsel %vm1167, %v1160, %v1164
        %v1169 = vand.u32 2147483647, %v1159
        %vm1170 = vcmp.eq.f32.partialorder %v1169, 8.507059e+37
        %v1171 = vand.u32 %v1159, 2147483648
        %v1172 = vor.u32 1.1754944e-38, %v1171
        %v1173 = vsel %vm1170, %v1172, %v1168
        %v1174 = vmul.f32 1.0, %v1173
        %v1175 = vtanh.pop %v1154
        %v1176 = vmul.f32 %v1174, %v1120
        %1178 = vrot.lane.b32.xlu0 %v1175, 32
        %v1179 = vpop.permute.xlu0 %1178
        %v1181 = vmul.f32 %v1174, %v1179
        %1183 = vrot.lane.b32.xlu0 %v1181, 32
        %v1184 = vpop.permute.xlu0 %1183
        %v1186 = vadd.f32 %v1176, %v1184
        %v1187 = vtanh.pop %v1186
        %1189 = vrot.lane.b32.xlu0 %v1187, 32
        %v1190 = vpop.permute.xlu0 %1189
        %v1192 = vmul.f32 %v1174, %v1190
        %1194 = vrot.lane.b32.xlu0 %v1192, 64
        %v1195 = vpop.permute.xlu0 %1194
        %s1197 = scalar_lea.vmem [#allocation3], 16
        %1198 = vst.msk [vmem:[%s1197] sm:$0xff] %vm662, %v1195
        %v1199 = vld [vmem:[#allocation2 + $0x38] sm:$0xff]
        %v1200 = vsel %vm662, %v1195, 0
        %1202 = vmatpush.msra.mxu0 0.0
        %1203 = vmatpush.msra.mxu0 0.0
        %1204 = vmatpush.msra.mxu0 0.0
        %1205 = vmatpush.msra.mxu0 0.0
        %1206 = vmatpush.msra.mxu0 0.0
        %1207 = vmatpush.msra.mxu0 0.0
        %1208 = vmatpush.msra.mxu0 0.0
        %1209 = vmatpush.msra.mxu0 0.0
        %1210 = vmatpush.msra.mxu0 0.0
        %1211 = vmatpush.msra.mxu0 0.0
        %1212 = vmatpush.msra.mxu0 0.0
        %1213 = vmatpush.msra.mxu0 0.0
        %1214 = vmatpush.msra.mxu0 %v739
        %1215 = vmatpush.msra.mxu0 %v738
        %1216 = vmatpush.msra.mxu0 %v737
        %1217 = vmatpush.msra.mxu0 %v736
        %1218 = vmatmul.f32.gmra.mxu0 %v1200
        %v1219 = vpop.f32.mrf.mxu0
        %v1220 = vadd.f32 %v1199, %v1219
        %1221 = vdwg.mxu0
        %v1222 = vxor.u32 %v1220, 2147483648
        %v1223 = vmul.f32 %v1222, 1.442695
        %v1224 = vpow.pop %v1223
        %v1225 = vadd.f32 %v1224, 1.0
        %v1226 = vrcp.pop %v1225
        %v1227 = vmul.f32 %v1225, %v1226
        %v1228 = vsub.f32 1.0, %v1227
        %v1229 = vmul.f32 %v1226, %v1228
        %v1230 = vadd.f32 %v1226, %v1229
        %vm1231 = vweird.f32 %v1225
        %vm1232 = vweird.f32 %v1226
        %vm1233 = vmor %vm1231, %vm1232
        %v1234 = vsel %vm1233, %v1226, %v1230
        %v1235 = vand.u32 2147483647, %v1225
        %vm1236 = vcmp.eq.f32.partialorder %v1235, 8.507059e+37
        %v1237 = vand.u32 %v1225, 2147483648
        %v1238 = vor.u32 1.1754944e-38, %v1237
        %v1239 = vsel %vm1236, %v1238, %v1234
        %v1240 = vmul.f32 1.0, %v1239
        %v1241 = vtanh.pop %v1220
        %v1242 = vmul.f32 %v1240, %v1186
        %1244 = vrot.lane.b32.xlu0 %v1241, 32
        %v1245 = vpop.permute.xlu0 %1244
        %v1247 = vmul.f32 %v1240, %v1245
        %1249 = vrot.lane.b32.xlu0 %v1247, 32
        %v1250 = vpop.permute.xlu0 %1249
        %v1252 = vadd.f32 %v1242, %v1250
        %v1253 = vtanh.pop %v1252
        %1255 = vrot.lane.b32.xlu0 %v1253, 32
        %v1256 = vpop.permute.xlu0 %1255
        %v1258 = vmul.f32 %v1240, %v1256
        %v1259 = vld [vmem:[%s8] sm:$0xff]
        %v1260 = vld [vmem:[%s8 + $0x8] sm:$0xff]
        %v1261 = vld [vmem:[%s8 + $0x10] sm:$0xff]
        %v1262 = vld [vmem:[%s8 + $0x18] sm:$0xff]
        %1264 = vrot.lane.b32.xlu0 %v1258, 64
        %v1265 = vpop.permute.xlu0 %1264
        %v1266 = vsel %vm662, %v1265, 0
        %1268 = vmatpush.msra.mxu0 0.0
        %1269 = vmatpush.msra.mxu0 0.0
        %1270 = vmatpush.msra.mxu0 0.0
        %1271 = vmatpush.msra.mxu0 0.0
        %1272 = vmatpush.msra.mxu0 0.0
        %1273 = vmatpush.msra.mxu0 0.0
        %1274 = vmatpush.msra.mxu0 0.0
        %1275 = vmatpush.msra.mxu0 0.0
        %1276 = vmatpush.msra.mxu0 0.0
        %1277 = vmatpush.msra.mxu0 0.0
        %1278 = vmatpush.msra.mxu0 0.0
        %1279 = vmatpush.msra.mxu0 0.0
        %1280 = vmatpush.msra.mxu0 %v1262
        %1281 = vmatpush.msra.mxu0 %v1261
        %1282 = vmatpush.msra.mxu0 %v1260
        %1283 = vmatpush.msra.mxu0 %v1259
        %1284 = vmatmul.f32.gmra.mxu0 %v1266
        %v1285 = vpop.f32.mrf.mxu0
        %v1286 = vadd.f32 0.0, %v1285
        %1287 = vdwg.mxu0
        %v1288 = vld [vmem:[#allocation3] sm:$0xff]
        %v1289 = vld [vmem:[%s6] sm:$0xff]
        %v1290 = vld [vmem:[%s6 + $0x8] sm:$0xff]
        %v1291 = vld [vmem:[%s6 + $0x10] sm:$0xff]
        %v1292 = vld [vmem:[%s6 + $0x18] sm:$0xff]
        %v1294 = vsel %vm662, %v1288, 0
        %1296 = vmatpush.msra.mxu0 0.0
        %1297 = vmatpush.msra.mxu0 0.0
        %1298 = vmatpush.msra.mxu0 0.0
        %1299 = vmatpush.msra.mxu0 0.0
        %1300 = vmatpush.msra.mxu0 0.0
        %1301 = vmatpush.msra.mxu0 0.0
        %1302 = vmatpush.msra.mxu0 0.0
        %1303 = vmatpush.msra.mxu0 0.0
        %1304 = vmatpush.msra.mxu0 0.0
        %1305 = vmatpush.msra.mxu0 0.0
        %1306 = vmatpush.msra.mxu0 0.0
        %1307 = vmatpush.msra.mxu0 0.0
        %1308 = vmatpush.msra.mxu0 %v1292
        %1309 = vmatpush.msra.mxu0 %v1291
        %1310 = vmatpush.msra.mxu0 %v1290
        %1311 = vmatpush.msra.mxu0 %v1289
        %1312 = vmatmul.f32.gmra.mxu0 %v1294
        %v1313 = vpop.f32.mrf.mxu0
        %v1314 = vadd.f32 %v1286, %v1313
        %1315 = vdwg.mxu0
        %v1316 = vtanh.pop %v1314
        %v1317 = vld [vmem:[%s7] sm:$0x1]
        %v1319 = vperm.slane %v1317, 0
        %v1321 = vmul.f32 %v1316, %v1319
        %v1322 = vsel %vm662, %v1321, 0.0
        %1323 = vadd.xlane.f32.xlu0 %v1322
        %v1324 = vpop.xlane.xlu0 %1323
        %v1325 = vld [vmem:[%s1131] sm:$0xff]
        %v1327 = vsel %vm662, %v1325, 0
        %1329 = vmatpush.msra.mxu0 0.0
        %1330 = vmatpush.msra.mxu0 0.0
        %1331 = vmatpush.msra.mxu0 0.0
        %1332 = vmatpush.msra.mxu0 0.0
        %1333 = vmatpush.msra.mxu0 0.0
        %1334 = vmatpush.msra.mxu0 0.0
        %1335 = vmatpush.msra.mxu0 0.0
        %1336 = vmatpush.msra.mxu0 0.0
        %1337 = vmatpush.msra.mxu0 0.0
        %1338 = vmatpush.msra.mxu0 0.0
        %1339 = vmatpush.msra.mxu0 0.0
        %1340 = vmatpush.msra.mxu0 0.0
        %1341 = vmatpush.msra.mxu0 %v1292
        %1342 = vmatpush.msra.mxu0 %v1291
        %1343 = vmatpush.msra.mxu0 %v1290
        %1344 = vmatpush.msra.mxu0 %v1289
        %1345 = vmatmul.f32.gmra.mxu0 %v1327
        %v1346 = vpop.f32.mrf.mxu0
        %v1347 = vadd.f32 %v1286, %v1346
        %1348 = vdwg.mxu0
        %v1349 = vtanh.pop %v1347
        %v1350 = vmul.f32 %v1349, %v1319
        %v1351 = vsel %vm662, %v1350, 0.0
        %1352 = vadd.xlane.f32.xlu0 %v1351
        %v1353 = vpop.xlane.xlu0 %1352
        %v1354 = vld [vmem:[%s1197] sm:$0xff]
        %v1356 = vsel %vm662, %v1354, 0
        %1358 = vmatpush.msra.mxu0 0.0
        %1359 = vmatpush.msra.mxu0 0.0
        %1360 = vmatpush.msra.mxu0 0.0
        %1361 = vmatpush.msra.mxu0 0.0
        %1362 = vmatpush.msra.mxu0 0.0
        %1363 = vmatpush.msra.mxu0 0.0
        %1364 = vmatpush.msra.mxu0 0.0
        %1365 = vmatpush.msra.mxu0 0.0
        %1366 = vmatpush.msra.mxu0 0.0
        %1367 = vmatpush.msra.mxu0 0.0
        %1368 = vmatpush.msra.mxu0 0.0
        %1369 = vmatpush.msra.mxu0 0.0
        %1370 = vmatpush.msra.mxu0 %v1292
        %1371 = vmatpush.msra.mxu0 %v1291
        %1372 = vmatpush.msra.mxu0 %v1290
        %1373 = vmatpush.msra.mxu0 %v1289
        %1374 = vmatmul.f32.gmra.mxu0 %v1356
        %v1375 = vpop.f32.mrf.mxu0
        %v1376 = vadd.f32 %v1286, %v1375
        %1377 = vdwg.mxu0
        %v1378 = vtanh.pop %v1376
        %v1379 = vmul.f32 %v1378, %v1319
        %v1380 = vsel %vm662, %v1379, 0.0
        %1381 = vadd.xlane.f32.xlu0 %v1380
        %v1382 = vpop.xlane.xlu0 %1381
        %vm1383 = vcmask 7168
        %v1384 = vsel %vm1383, %v1324, %v1353
        %vm1385 = vcmask 15360
        %v1386 = vsel %vm1385, %v1384, %v1382
        %vm1387 = vcmask 23552
        %v1388 = vsel %vm1387, %v1386, -inf
        %1389 = vmax.xlane.f32.xlu0 %v1388
        %v1390 = vpop.xlane.xlu0 %1389
        %v1391 = vsub.f32 %v1386, %v1390
        %v1392 = vmul.f32 %v1391, 1.442695
        %v1393 = vpow.pop %v1392
        %v1394 = vsel %vm1387, %v1393, 0.0
        %1395 = vadd.xlane.f32.xlu0 %v1394
        %v1396 = vpop.xlane.xlu0 %1395
        %v1397 = vlog2.pop %v1396
        %v1398 = vmul.f32 %v1397, 0.6931472
        %v1399 = vsub.f32 %v1391, %v1398
        %1401 = vset.pattern.permute.xlu0 0
        %1402 = vperm.xlu0 %1401, %v1399
        %v1403 = vpop.permute.xlu0 %1402
        %v1405 = vmul.f32 %v1403, %v1288
        %1406 = vset.pattern.permute.xlu0 1
        %1407 = vperm.xlu0 %1406, %v1399
        %v1408 = vpop.permute.xlu0 %1407
        %v1410 = vmul.f32 %v1408, %v1325
        %v1411 = vadd.f32 %v1405, %v1410
        %1412 = vset.pattern.permute.xlu0 2
        %1413 = vperm.xlu0 %1412, %v1399
        %v1414 = vpop.permute.xlu0 %1413
        %v1416 = vmul.f32 %v1414, %v1354
        %v1417 = vadd.f32 %v1411, %v1416
        %v1418 = vld [vmem:[%s9] sm:$0xff]
        %v1419 = vld [vmem:[%s9 + $0x8] sm:$0xff]
        %v1420 = vld [vmem:[%s9 + $0x10] sm:$0xff]
        %v1421 = vld [vmem:[%s9 + $0x18] sm:$0xff]
        %v1422 = vld [vmem:[%s10] sm:$0xff]
        %v1423 = vld [vmem:[%s10 + $0x8] sm:$0xff]
        %v1424 = vld [vmem:[%s10 + $0x10] sm:$0xff]
        %v1425 = vld [vmem:[%s10 + $0x18] sm:$0xff]
        %v1427 = vsel %vm662, %v1417, 0
        %1429 = vmatpush.msra.mxu0 0.0
        %1430 = vmatpush.msra.mxu0 0.0
        %1431 = vmatpush.msra.mxu0 0.0
        %1432 = vmatpush.msra.mxu0 0.0
        %1433 = vmatpush.msra.mxu0 0.0
        %1434 = vmatpush.msra.mxu0 0.0
        %1435 = vmatpush.msra.mxu0 0.0
        %1436 = vmatpush.msra.mxu0 0.0
        %1437 = vmatpush.msra.mxu0 0.0
        %1438 = vmatpush.msra.mxu0 0.0
        %1439 = vmatpush.msra.mxu0 0.0
        %1440 = vmatpush.msra.mxu0 0.0
        %1441 = vmatpush.msra.mxu0 %v1425
        %1442 = vmatpush.msra.mxu0 %v1424
        %1443 = vmatpush.msra.mxu0 %v1423
        %1444 = vmatpush.msra.mxu0 %v1422
        %1445 = vmatmul.f32.gmra.mxu0 %v1427
        %v1446 = vpop.f32.mrf.mxu0
        %v1447 = vadd.f32 0.0, %v1446
        %1448 = vdwg.mxu0
        %1449 = vmatpush.msra.mxu0 0.0
        %1450 = vmatpush.msra.mxu0 0.0
        %1451 = vmatpush.msra.mxu0 0.0
        %1452 = vmatpush.msra.mxu0 0.0
        %1453 = vmatpush.msra.mxu0 0.0
        %1454 = vmatpush.msra.mxu0 0.0
        %1455 = vmatpush.msra.mxu0 0.0
        %1456 = vmatpush.msra.mxu0 0.0
        %1457 = vmatpush.msra.mxu0 0.0
        %1458 = vmatpush.msra.mxu0 0.0
        %1459 = vmatpush.msra.mxu0 0.0
        %1460 = vmatpush.msra.mxu0 0.0
        %1461 = vmatpush.msra.mxu0 %v1421
        %1462 = vmatpush.msra.mxu0 %v1420
        %1463 = vmatpush.msra.mxu0 %v1419
        %1464 = vmatpush.msra.mxu0 %v1418
        %1465 = vmatmul.f32.gmra.mxu0 %v1266
        %v1466 = vpop.f32.mrf.mxu0
        %v1467 = vadd.f32 %v1447, %v1466
        %1468 = vdwg.mxu0
        %v1469 = vtanh.pop %v1467
        %v1470 = vld [vmem:[%s11] sm:$0xff]
        %v1471 = vld [vmem:[%s11 + $0x8] sm:$0xff]
        %v1472 = vld [vmem:[%s11 + $0x10] sm:$0xff]
        %v1473 = vld [vmem:[%s11 + $0x18] sm:$0xff]
        %v1474 = vld [vmem:[%s12] sm:$0x1]
        %v1476 = vperm.slane %v1474, 0
        %v1479 = vsel %vm662, %v1469, 0
        %1481 = vmatpush.msra.mxu0 0.0
        %1482 = vmatpush.msra.mxu0 0.0
        %1483 = vmatpush.msra.mxu0 0.0
        %1484 = vmatpush.msra.mxu0 0.0
        %1485 = vmatpush.msra.mxu0 0.0
        %1486 = vmatpush.msra.mxu0 0.0
        %1487 = vmatpush.msra.mxu0 0.0
        %1488 = vmatpush.msra.mxu0 0.0
        %1489 = vmatpush.msra.mxu0 0.0
        %1490 = vmatpush.msra.mxu0 0.0
        %1491 = vmatpush.msra.mxu0 0.0
        %1492 = vmatpush.msra.mxu0 0.0
        %1493 = vmatpush.msra.mxu0 %v1473
        %1494 = vmatpush.msra.mxu0 %v1472
        %1495 = vmatpush.msra.mxu0 %v1471
        %1496 = vmatpush.msra.mxu0 %v1470
        %1497 = vmatmul.f32.gmra.mxu0 %v1479
        %v1498 = vpop.f32.mrf.mxu0
        %v1499 = vadd.f32 %v1476, %v1498
        %1500 = vdwg.mxu0
        %1501 = vmax.xlane.f32.xlu0 %v1499
        %v1502 = vpop.xlane.xlu0 %1501
        %v1503 = vsub.f32 %v1499, %v1502
        %v1504 = vmul.f32 %v1503, 1.442695
        %v1505 = vpow.pop %v1504
        %1506 = vadd.xlane.f32.xlu0 %v1505
        %v1507 = vpop.xlane.xlu0 %1506
        %v1508 = vlog2.pop %v1507
        %v1509 = vmul.f32 %v1508, 0.6931472
        %v1510 = vsub.f32 %v1503, %v1509
        %v1511 = vld [vmem:[%s13] sm:$0x1]
        %v1513 = vperm.slane %v1511, 0
        %1514 = vrot.lane.b32.xlu0 %v1513, 64
        %v1515 = vpop.permute.xlu0 %1514
        %v1517 = vmul.f32 %v1258, %v1515
        %1519 = vrot.lane.b32.xlu0 %v1517, 64
        %v1520 = vpop.permute.xlu0 %1519
        %v1522 = vsel %vm662, %v1520, 0.0
        %1523 = vadd.xlane.f32.xlu0 %v1522
        %v1524 = vpop.xlane.xlu0 %1523
        %v1525 = vld [vmem:[%s14] sm:$0x1]
        %v1527 = vperm.slane %v1525, 0
        %v1529 = vmul.f32 %v1417, %v1527
        %v1530 = vsel %vm662, %v1529, 0.0
        %1531 = vadd.xlane.f32.xlu0 %v1530
        %v1532 = vpop.xlane.xlu0 %1531
        %v1533 = vadd.f32 %v1524, %v1532
        %v1534 = vld [vmem:[#allocation4] sm:$0x1]
        %v1536 = vperm.slane %v1534, 0
        %v1538 = vadd.f32 %v1533, %v1536
        %v1539 = vxor.u32 %v1538, 2147483648
        %v1540 = vmul.f32 %v1539, 1.442695
        %v1541 = vpow.pop %v1540
        %v1542 = vadd.f32 %v1541, 1.0
        %v1543 = vrcp.pop %v1542
        %v1544 = vmul.f32 %v1542, %v1543
        %v1545 = vsub.f32 1.0, %v1544
        %v1546 = vmul.f32 %v1543, %v1545
        %v1547 = vadd.f32 %v1543, %v1546
        %vm1548 = vweird.f32 %v1542
        %vm1549 = vweird.f32 %v1543
        %vm1550 = vmor %vm1548, %vm1549
        %v1551 = vsel %vm1550, %v1543, %v1547
        %v1552 = vand.u32 2147483647, %v1542
        %vm1553 = vcmp.eq.f32.partialorder %v1552, 8.507059e+37
        %v1554 = vand.u32 %v1542, 2147483648
        %v1555 = vor.u32 1.1754944e-38, %v1554
        %v1556 = vsel %vm1553, %v1555, %v1551
        %v1557 = vmul.f32 1.0, %v1556
        %v1558 = vsub.f32 1.0, %v1557
        %1560 = vset.pattern.permute.xlu0 0
        %1561 = vperm.xlu0 %1560, %v1558
        %v1562 = vpop.permute.xlu0 %1561
        %v1564 = vmul.f32 %v1562, %v1399
        %v1565 = vld [vmem:[%s16] sm:$0x7]
        %v1567 = vsel %vm1387, %v1564, 0
        %vm1569 = vcmask 1042432
        %v1571 = vsel %vm1569, %v1565, 0
        %1573 = vmatpush.msra.mxu0 0.0
        %1574 = vmatpush.msra.mxu0 0.0
        %1575 = vmatpush.msra.mxu0 0.0
        %1576 = vmatpush.msra.mxu0 0.0
        %1577 = vmatpush.msra.mxu0 0.0
        %1578 = vmatpush.msra.mxu0 0.0
        %1579 = vmatpush.msra.mxu0 0.0
        %1580 = vmatpush.msra.mxu0 0.0
        %1581 = vmatpush.msra.mxu0 0.0
        %1582 = vmatpush.msra.mxu0 0.0
        %1583 = vmatpush.msra.mxu0 0.0
        %1584 = vmatpush.msra.mxu0 0.0
        %1585 = vmatpush.msra.mxu0 0.0
        %1586 = vmatpush.msra.mxu0 0.0
        %1587 = vmatpush.msra.mxu0 0.0
        %1588 = vmatpush.msra.mxu0 %v1571
        %1589 = vmatmul.f32.gmra.mxu0 %v1567
        %v1590 = vpop.f32.mrf.mxu0
        %v1591 = vadd.f32 0.0, %v1590
        %1592 = vdwg.mxu0
        %v1593 = vlaneseq
        %v1594 = vand.u32 %v1593, 127
        %vm1595 = vcmp.lt.s32.totalorder %v1594, 40
        %1597 = vset.pattern.permute.xlu0 0
        %1598 = vperm.xlu0 %1597, %v1557
        %v1599 = vpop.permute.xlu0 %1598
        %v1601 = vmul.f32 %v1599, %v1510
        %v1602 = vsel %vm1595, %v1601, %v1591
        %1603 = vst [vmem:[%s637] sm:$0xff] %v1602
        %s1604 = sand.u32 %s413, 1
        %s1605 = scalar_lea.sflag [#allocation7], %s1604
        %s1606 = sand.u32 %s413, 1
        %s1607 = smul.addr %s1606, 8
        %s1608 = scalar_lea.vmem [#allocation6], %s1607
        // Predicated region
        $region127: #{main_model_forward.1} parent=121 // pred_check
          %p1609 = pneg %p423
        $region128: #{main_model_forward.1} parent=121 // pred_check_branch
          %1611 = sbr.rel (%p1609) target = $region130
        $region129: #{main_model_forward.1} parent=121 // pred_region
          %1613 = vsyncadd %s1605, 0
          %s1614 = smul.addr %s33, 8
          %s1615 = scalar_lea.hbm %s17, %s1614
          %s1617 = sshll.u32 %s1608, 4
          %s1618 = int_to_ptr.vmem [resolvable:$true] %s1617
          %s1619 = sshll.u32 %s1615, 4
          %s1620 = int_to_ptr.hbm [resolvable:$true] %s1619
          %1622 = dma.vmem_to_hbm [thread:$0]  %s1618, 128, %s1620, %s1605
        $region130: #{main_model_forward.1} parent=121 // pred_fallthru
          _
      $region122: #{main_model_forward.1} parent=5 // pred_fallthru
        _
      %p1623 = scmp.le.s32.totalorder 2, %s28
      // Predicated region
      $region131: #{main_model_forward.1} parent=5 // pred_check
        %p1624 = pneg %p1623
      $region132: #{main_model_forward.1} parent=5 // pred_check_branch
        %1626 = sbr.rel (%p1624) target = $region134
      $region133: #{main_model_forward.1} parent=5 // pred_region
        %s1627 = ssub.s32 %s28, 2
        // Predicated region
        $region135: #{main_model_forward.1} parent=133 // pred_check
          %p1628 = pneg %p429
        $region136: #{main_model_forward.1} parent=133 // pred_check_branch
          %1630 = sbr.rel (%p1628) target = $region138
        $region137: #{main_model_forward.1} parent=133 // pred_region
          %s1631 = sand.u32 %s414, 1
          %s1632 = scalar_lea.sflag [#allocation7], %s1631
          %s1633 = sand.u32 %s414, 1
          %s1634 = smul.addr %s1633, 8
          %s1635 = scalar_lea.vmem [#allocation6], %s1634
          %1637 = dma.done %s1632, 128
        $region138: #{main_model_forward.1} parent=133 // pred_fallthru
          _
      $region134: #{main_model_forward.1} parent=5 // pred_fallthru
        _
    $region6: #{main_model_forward.1} parent=1 // loop_footer
      %s32 = sadd.s32 1, %s28
    $region7: #{main_model_forward.1} parent=1 // loop_footer_branch
      %27 = sbr.rel target = $region3
    $region8: #{main_model_forward.1} parent=1 // loop_exit
      _
    %1638 = vsyncpa [#allocation7], 1
    %s1639 = scalar_lea.sflag [#allocation7], 1
    %1640 = vsyncpa %s1639, 1

</llo_original>
